<compile_context>
chip_gen: v5e
topology: v5e:2x2
jax: 0.10.0
libtpu: 0.0.40
codegen_flags: <defaults>
</compile_context>

<pallas_src>
import functools

import jax
import jax.numpy as jnp
import numpy as np
from jax.experimental import pallas as pl
from jax.experimental.pallas import tpu as pltpu


def _sliding_max(v, window):
    """v: (L, C) -> (L - window + 1, C), out[i] = max(v[i:i+window])."""
    cov = 1
    while 2 * cov <= window:
        v = jnp.maximum(v[: v.shape[0] - cov], v[cov:])
        cov *= 2
    if cov < window:
        r = window - cov
        v = jnp.maximum(v[: v.shape[0] - r], v[r:])
    return v


def ae_block_kernel(p_ref, w1_ref, b1_ref, d_ref, g_ref, b2_ref, e_ref, out_ref,
                    *, ho, kw2, pool1_k, pool2_k):
    # ---- Layer 1 conv: per output row h, (Wc1,K1)x(K1,ho*C1) matmul whose
    # weights are pre-placed into lane block [h*C1,(h+1)*C1); summing the ho
    # results assembles the (Wc1, ho*C1) slab (W on sublanes, (h,c) on lanes).
    y1 = jnp.dot(p_ref[0], w1_ref[0], preferred_element_type=jnp.float32)
    for h in range(1, ho):
        y1 += jnp.dot(p_ref[h], w1_ref[h], preferred_element_type=jnp.float32)
    y1 += b1_ref[...]

    # ---- MaxPool (1,64) stride (1,3): sliding-window max via shifted-max tree;
    # the stride-3 decimation is folded into the selection matmul d_ref, which
    # simultaneously performs the layer-2 im2col row gather. ReLU commutes.
    m1 = _sliding_max(y1, pool1_k)                                     # (Lm1, ho*C1)
    a = jnp.maximum(
        jnp.dot(d_ref[...], m1, preferred_element_type=jnp.float32), 0.0)  # (kw2*Wc2, ho*C1)

    # ---- Layer 2 conv: per kernel tap dw, block-diagonal (over h) weight maps
    # lanes (h, ci) -> (h, co).
    wc2 = a.shape[0] // kw2
    y2 = jnp.dot(a[:wc2], g_ref[0], preferred_element_type=jnp.float32)
    for dw in range(1, kw2):
        y2 += jnp.dot(a[dw * wc2:(dw + 1) * wc2], g_ref[dw],
                      preferred_element_type=jnp.float32)
    y2 += b2_ref[...]

    # ---- MaxPool (1,3) stride (1,2) + ReLU; stride-2 decimation as matmul.
    m2 = _sliding_max(y2, pool2_k)                                      # (Lm2, ho*C2)
    out_ref[...] = jnp.maximum(
        jnp.dot(e_ref[...], m2, preferred_element_type=jnp.float32), 0.0)


def im2col_nhwc(x, kh, kw, sh, sw):
    # x: (N, H, W, C) -> (N, Ho, Wo, C*kh*kw); features ordered (c, dh, dw) to
    # match torch weight.reshape(out_c, in_c*kh*kw).
    n, h, w, c = x.shape
    ho = (h - kh) // sh + 1
    wo = (w - kw) // sw + 1
    cols = []
    for ci in range(c):
        for dh in range(kh):
            for dw in range(kw):
                cols.append(x[:, dh:dh + sh * ho:sh, dw:dw + sw * wo:sw, ci])
    return jnp.stack(cols, axis=-1)


@jax.jit
def ae_block_forward(x, w1, b1, w2, b2):
    # x: (N, 1, H, W) NCHW (PyTorch). Returns NCHW output (N, 32, Ho, Wp2).
    n, _, hin, win = x.shape
    c1, _, kh1, kw1 = w1.shape            # (16, 1, 2, 128)
    c2, _, _, kw2 = w2.shape              # (32, 16, 1, 2)
    sh1, sw1 = 1, 5
    p1k, p1s = 64, 3
    sw2 = 4
    p2k, p2s = 3, 2

    ho = (hin - kh1) // sh1 + 1           # 5
    wc1 = (win - kw1) // sw1 + 1          # 180
    wp1 = (wc1 - p1k) // p1s + 1          # 39
    wc2 = (wp1 - kw2) // sw2 + 1          # 10
    wp2 = (wc2 - p2k) // p2s + 1          # 4
    lm1 = wc1 - p1k + 1                   # 117
    lm2 = wc2 - p2k + 1                   # 8
    k1 = kh1 * kw1                        # 256 (in_channels == 1)

    # Layer-1 im2col patches, bf16 to halve DMA bytes into the kernel.
    x_nhwc = jnp.transpose(x, (0, 2, 3, 1))
    p1 = im2col_nhwc(x_nhwc, kh1, kw1, sh1, sw1).astype(jnp.bfloat16)  # (N,ho,wc1,k1)

    # Layer-1 weights, lane-placed: row h writes lane block [h*c1,(h+1)*c1).
    w1m = jnp.transpose(w1.reshape(c1, k1))                            # (k1, c1)
    w1p = jnp.stack([
        jnp.zeros((k1, ho * c1), jnp.float32).at[:, h * c1:(h + 1) * c1].set(w1m)
        for h in range(ho)]).astype(jnp.bfloat16)                      # (ho, k1, ho*c1)
    b1t = jnp.tile(b1.reshape(1, c1), (1, ho))                         # (1, ho*c1)

    # Selection matmul D: picks rows p1s*(sw2*w2 + dw) of the sliding-max slab
    # (= maxpool1 stride-3 decimation fused with layer-2 im2col row gather).
    rows = np.arange(kw2 * wc2)
    col_idx = p1s * (sw2 * (rows % wc2) + rows // wc2)
    d_mat = jnp.asarray(
        (np.arange(lm1)[None, :] == col_idx[:, None]).astype(np.float32))  # (kw2*wc2, lm1)

    # Layer-2 weights: per tap dw, block-diagonal over h, lanes (h,ci)->(h,co).
    g_mat = jnp.stack([
        jnp.kron(jnp.eye(ho, dtype=jnp.float32), jnp.transpose(w2[:, :, 0, dw]))
        for dw in range(kw2)])                                          # (kw2, ho*c1, ho*c2)
    b2t = jnp.tile(b2.reshape(1, c2), (1, ho))                          # (1, ho*c2)

    # Selection matmul E: maxpool2 stride-2 decimation.
    e_mat = jnp.asarray(
        (np.arange(lm2)[None, :] == (p2s * np.arange(wp2))[:, None]).astype(np.float32))

    kernel = functools.partial(ae_block_kernel, ho=ho, kw2=kw2,
                               pool1_k=p1k, pool2_k=p2k)
    out = pl.pallas_call(
        kernel,
        out_shape=jax.ShapeDtypeStruct((n, wp2, ho * c2), jnp.float32),
        grid=(n,),
        in_specs=[
            pl.BlockSpec((None, ho, wc1, k1), lambda i: (i, 0, 0, 0)),
            pl.BlockSpec((ho, k1, ho * c1), lambda i: (0, 0, 0)),
            pl.BlockSpec((1, ho * c1), lambda i: (0, 0)),
            pl.BlockSpec((kw2 * wc2, lm1), lambda i: (0, 0)),
            pl.BlockSpec((kw2, ho * c1, ho * c2), lambda i: (0, 0, 0)),
            pl.BlockSpec((1, ho * c2), lambda i: (0, 0)),
            pl.BlockSpec((wp2, lm2), lambda i: (0, 0)),
        ],
        out_specs=pl.BlockSpec((None, wp2, ho * c2), lambda i: (i, 0, 0)),
        compiler_params=pltpu.CompilerParams(
            dimension_semantics=("parallel",)),
    )(p1, w1p, b1t, d_mat, g_mat, b2t, e_mat)

    # (N, wp2, ho*c2) with lane index = h*c2 + co  ->  NCHW (N, c2, ho, wp2).
    return jnp.transpose(out.reshape(n, wp2, ho, c2), (0, 3, 2, 1))


def ref_forward(x, w1, b1, w2, b2):
    # Pure-JAX reference (lax conv + reduce_window), used only for verification.
    def conv(v, w, b, stride):
        y = jax.lax.conv_general_dilated(
            v, w, window_strides=stride, padding="VALID",
            dimension_numbers=("NCHW", "OIHW", "NCHW"),
            precision=jax.lax.Precision.HIGHEST)
        return y + b[None, :, None, None]

    def maxpool(v, k, s):
        return jax.lax.reduce_window(
            v, -jnp.inf, jax.lax.max,
            window_dimensions=(1, 1) + k, window_strides=(1, 1) + s,
            padding="VALID")

    y = jnp.maximum(maxpool(conv(x, w1, b1, (1, 5)), (1, 64), (1, 3)), 0.0)
    y = jnp.maximum(maxpool(conv(y, w2, b2, (1, 4)), (1, 3), (1, 2)), 0.0)
    return y


if __name__ == "__main__":
    key = jax.random.PRNGKey(0)
    kk1, kk2, kk3, kk4, kx = jax.random.split(key, 5)
    # Deterministic synthetic parameters (shapes from AE_block.__init__).
    w1 = jax.random.normal(kk1, (16, 1, 2, 128), jnp.float32) * 0.05
    b1 = jax.random.normal(kk2, (16,), jnp.float32) * 0.05
    w2 = jax.random.normal(kk3, (32, 16, 1, 2), jnp.float32) * 0.05
    b2 = jax.random.normal(kk4, (32,), jnp.float32) * 0.05
    # Small input consistent with the module: batch=2, 1 channel, 6 sensor
    # rows, signal length 1024 (kernel width 128 / pool 64 require W >= 578).
    x = jax.random.normal(kx, (2, 1, 6, 1024), jnp.float32)

    out = jax.block_until_ready(ae_block_forward(x, w1, b1, w2, b2))
    ref = jax.block_until_ready(ref_forward(x, w1, b1, w2, b2))
    assert out.shape == ref.shape == (2, 32, 5, 4), (out.shape, ref.shape)
    np.testing.assert_allclose(np.asarray(out), np.asarray(ref),
                               rtol=2e-2, atol=2e-2)
    print("KERNEL_OK")
</pallas_src>

<mosaic_0001>
module attributes {stable_mosaic.version = 11 : i64} {
  func.func @ae_block_kernel(%arg0: i32, %arg1: memref<1x5x180x256xbf16, #tpu.memory_space<vmem>>, %arg2: memref<5x256x80xbf16, #tpu.memory_space<vmem>>, %arg3: memref<1x80xf32, #tpu.memory_space<vmem>>, %arg4: memref<20x117xf32, #tpu.memory_space<vmem>>, %arg5: memref<2x80x160xf32, #tpu.memory_space<vmem>>, %arg6: memref<1x160xf32, #tpu.memory_space<vmem>>, %arg7: memref<4x8xf32, #tpu.memory_space<vmem>>, %arg8: memref<1x4x160xf32, #tpu.memory_space<vmem>>) attributes {dimension_semantics = [#tpu.dimension_semantics<parallel>], iteration_bounds = array<i64: 2>, scalar_prefetch = 0 : i64, scratch_operands = 0 : i64, tpu.core_type = #tpu.core_type<tc>, window_params = [{transform_indices = @transform_0, window_bounds = array<i64: 1, 5, 180, 256>}, {pipeline_mode = #tpu.pipeline_mode<synchronous>, transform_indices = @transform_1, window_bounds = array<i64: 5, 256, 80>}, {pipeline_mode = #tpu.pipeline_mode<synchronous>, transform_indices = @transform_2, window_bounds = array<i64: 1, 80>}, {pipeline_mode = #tpu.pipeline_mode<synchronous>, transform_indices = @transform_3, window_bounds = array<i64: 20, 117>}, {pipeline_mode = #tpu.pipeline_mode<synchronous>, transform_indices = @transform_4, window_bounds = array<i64: 2, 80, 160>}, {pipeline_mode = #tpu.pipeline_mode<synchronous>, transform_indices = @transform_5, window_bounds = array<i64: 1, 160>}, {pipeline_mode = #tpu.pipeline_mode<synchronous>, transform_indices = @transform_6, window_bounds = array<i64: 4, 8>}, {transform_indices = @transform_7, window_bounds = array<i64: 1, 4, 160>}]} {
    %c0 = arith.constant 0 : index
    %c0_0 = arith.constant 0 : index
    %c0_1 = arith.constant 0 : index
    %c0_2 = arith.constant 0 : index
    %0 = vector.load %arg1[%c0, %c0_0, %c0_1, %c0_2] : memref<1x5x180x256xbf16, #tpu.memory_space<vmem>>, vector<1x1x180x256xbf16>
    %1 = vector.shape_cast %0 : vector<1x1x180x256xbf16> to vector<180x256xbf16>
    %c0_3 = arith.constant 0 : index
    %c0_4 = arith.constant 0 : index
    %c0_5 = arith.constant 0 : index
    %2 = vector.load %arg2[%c0_3, %c0_4, %c0_5] : memref<5x256x80xbf16, #tpu.memory_space<vmem>>, vector<1x256x80xbf16>
    %3 = vector.shape_cast %2 : vector<1x256x80xbf16> to vector<256x80xbf16>
    %cst = arith.constant dense<0.000000e+00> : vector<180x80xf32>
    %4 = tpu.matmul %1, %3, %cst {dimension_numbers = #tpu.dot_dimension_numbers<[1], [0], [0], [1], [0, 0, 1, 1], [], []>} : vector<180x256xbf16>, vector<256x80xbf16>, vector<180x80xf32> -> vector<180x80xf32>
    %c0_6 = arith.constant 0 : index
    %c1 = arith.constant 1 : index
    %c0_7 = arith.constant 0 : index
    %c0_8 = arith.constant 0 : index
    %5 = vector.load %arg1[%c0_6, %c1, %c0_7, %c0_8] : memref<1x5x180x256xbf16, #tpu.memory_space<vmem>>, vector<1x1x180x256xbf16>
    %6 = vector.shape_cast %5 : vector<1x1x180x256xbf16> to vector<180x256xbf16>
    %c1_9 = arith.constant 1 : index
    %c0_10 = arith.constant 0 : index
    %c0_11 = arith.constant 0 : index
    %7 = vector.load %arg2[%c1_9, %c0_10, %c0_11] : memref<5x256x80xbf16, #tpu.memory_space<vmem>>, vector<1x256x80xbf16>
    %8 = vector.shape_cast %7 : vector<1x256x80xbf16> to vector<256x80xbf16>
    %cst_12 = arith.constant dense<0.000000e+00> : vector<180x80xf32>
    %9 = tpu.matmul %6, %8, %cst_12 {dimension_numbers = #tpu.dot_dimension_numbers<[1], [0], [0], [1], [0, 0, 1, 1], [], []>} : vector<180x256xbf16>, vector<256x80xbf16>, vector<180x80xf32> -> vector<180x80xf32>
    %10 = arith.addf %4, %9 : vector<180x80xf32>
    %c0_13 = arith.constant 0 : index
    %c2 = arith.constant 2 : index
    %c0_14 = arith.constant 0 : index
    %c0_15 = arith.constant 0 : index
    %11 = vector.load %arg1[%c0_13, %c2, %c0_14, %c0_15] : memref<1x5x180x256xbf16, #tpu.memory_space<vmem>>, vector<1x1x180x256xbf16>
    %12 = vector.shape_cast %11 : vector<1x1x180x256xbf16> to vector<180x256xbf16>
    %c2_16 = arith.constant 2 : index
    %c0_17 = arith.constant 0 : index
    %c0_18 = arith.constant 0 : index
    %13 = vector.load %arg2[%c2_16, %c0_17, %c0_18] : memref<5x256x80xbf16, #tpu.memory_space<vmem>>, vector<1x256x80xbf16>
    %14 = vector.shape_cast %13 : vector<1x256x80xbf16> to vector<256x80xbf16>
    %cst_19 = arith.constant dense<0.000000e+00> : vector<180x80xf32>
    %15 = tpu.matmul %12, %14, %cst_19 {dimension_numbers = #tpu.dot_dimension_numbers<[1], [0], [0], [1], [0, 0, 1, 1], [], []>} : vector<180x256xbf16>, vector<256x80xbf16>, vector<180x80xf32> -> vector<180x80xf32>
    %16 = arith.addf %10, %15 : vector<180x80xf32>
    %c0_20 = arith.constant 0 : index
    %c3 = arith.constant 3 : index
    %c0_21 = arith.constant 0 : index
    %c0_22 = arith.constant 0 : index
    %17 = vector.load %arg1[%c0_20, %c3, %c0_21, %c0_22] : memref<1x5x180x256xbf16, #tpu.memory_space<vmem>>, vector<1x1x180x256xbf16>
    %18 = vector.shape_cast %17 : vector<1x1x180x256xbf16> to vector<180x256xbf16>
    %c3_23 = arith.constant 3 : index
    %c0_24 = arith.constant 0 : index
    %c0_25 = arith.constant 0 : index
    %19 = vector.load %arg2[%c3_23, %c0_24, %c0_25] : memref<5x256x80xbf16, #tpu.memory_space<vmem>>, vector<1x256x80xbf16>
    %20 = vector.shape_cast %19 : vector<1x256x80xbf16> to vector<256x80xbf16>
    %cst_26 = arith.constant dense<0.000000e+00> : vector<180x80xf32>
    %21 = tpu.matmul %18, %20, %cst_26 {dimension_numbers = #tpu.dot_dimension_numbers<[1], [0], [0], [1], [0, 0, 1, 1], [], []>} : vector<180x256xbf16>, vector<256x80xbf16>, vector<180x80xf32> -> vector<180x80xf32>
    %22 = arith.addf %16, %21 : vector<180x80xf32>
    %c0_27 = arith.constant 0 : index
    %c4 = arith.constant 4 : index
    %c0_28 = arith.constant 0 : index
    %c0_29 = arith.constant 0 : index
    %23 = vector.load %arg1[%c0_27, %c4, %c0_28, %c0_29] : memref<1x5x180x256xbf16, #tpu.memory_space<vmem>>, vector<1x1x180x256xbf16>
    %24 = vector.shape_cast %23 : vector<1x1x180x256xbf16> to vector<180x256xbf16>
    %c4_30 = arith.constant 4 : index
    %c0_31 = arith.constant 0 : index
    %c0_32 = arith.constant 0 : index
    %25 = vector.load %arg2[%c4_30, %c0_31, %c0_32] : memref<5x256x80xbf16, #tpu.memory_space<vmem>>, vector<1x256x80xbf16>
    %26 = vector.shape_cast %25 : vector<1x256x80xbf16> to vector<256x80xbf16>
    %cst_33 = arith.constant dense<0.000000e+00> : vector<180x80xf32>
    %27 = tpu.matmul %24, %26, %cst_33 {dimension_numbers = #tpu.dot_dimension_numbers<[1], [0], [0], [1], [0, 0, 1, 1], [], []>} : vector<180x256xbf16>, vector<256x80xbf16>, vector<180x80xf32> -> vector<180x80xf32>
    %28 = arith.addf %22, %27 : vector<180x80xf32>
    %c0_34 = arith.constant 0 : index
    %c0_35 = arith.constant 0 : index
    %29 = vector.load %arg3[%c0_34, %c0_35] : memref<1x80xf32, #tpu.memory_space<vmem>>, vector<1x80xf32>
    %30 = vector.broadcast %29 : vector<1x80xf32> to vector<180x80xf32>
    %31 = arith.addf %28, %30 : vector<180x80xf32>
    %32 = vector.extract_strided_slice %31 {offsets = [0, 0], sizes = [179, 80], strides = [1, 1]} : vector<180x80xf32> to vector<179x80xf32>
    %33 = vector.extract_strided_slice %31 {offsets = [1, 0], sizes = [179, 80], strides = [1, 1]} : vector<180x80xf32> to vector<179x80xf32>
    %34 = arith.maximumf %32, %33 : vector<179x80xf32>
    %35 = vector.extract_strided_slice %34 {offsets = [0, 0], sizes = [177, 80], strides = [1, 1]} : vector<179x80xf32> to vector<177x80xf32>
    %36 = vector.extract_strided_slice %34 {offsets = [2, 0], sizes = [177, 80], strides = [1, 1]} : vector<179x80xf32> to vector<177x80xf32>
    %37 = arith.maximumf %35, %36 : vector<177x80xf32>
    %38 = vector.extract_strided_slice %37 {offsets = [0, 0], sizes = [173, 80], strides = [1, 1]} : vector<177x80xf32> to vector<173x80xf32>
    %39 = vector.extract_strided_slice %37 {offsets = [4, 0], sizes = [173, 80], strides = [1, 1]} : vector<177x80xf32> to vector<173x80xf32>
    %40 = arith.maximumf %38, %39 : vector<173x80xf32>
    %41 = vector.extract_strided_slice %40 {offsets = [0, 0], sizes = [165, 80], strides = [1, 1]} : vector<173x80xf32> to vector<165x80xf32>
    %42 = vector.extract_strided_slice %40 {offsets = [8, 0], sizes = [165, 80], strides = [1, 1]} : vector<173x80xf32> to vector<165x80xf32>
    %43 = arith.maximumf %41, %42 : vector<165x80xf32>
    %44 = vector.extract_strided_slice %43 {offsets = [0, 0], sizes = [149, 80], strides = [1, 1]} : vector<165x80xf32> to vector<149x80xf32>
    %45 = vector.extract_strided_slice %43 {offsets = [16, 0], sizes = [149, 80], strides = [1, 1]} : vector<165x80xf32> to vector<149x80xf32>
    %46 = arith.maximumf %44, %45 : vector<149x80xf32>
    %47 = vector.extract_strided_slice %46 {offsets = [0, 0], sizes = [117, 80], strides = [1, 1]} : vector<149x80xf32> to vector<117x80xf32>
    %48 = vector.extract_strided_slice %46 {offsets = [32, 0], sizes = [117, 80], strides = [1, 1]} : vector<149x80xf32> to vector<117x80xf32>
    %49 = arith.maximumf %47, %48 : vector<117x80xf32>
    %c0_36 = arith.constant 0 : index
    %c0_37 = arith.constant 0 : index
    %50 = vector.load %arg4[%c0_36, %c0_37] : memref<20x117xf32, #tpu.memory_space<vmem>>, vector<20x117xf32>
    %cst_38 = arith.constant dense<0.000000e+00> : vector<20x80xf32>
    %51 = tpu.matmul %50, %49, %cst_38 {dimension_numbers = #tpu.dot_dimension_numbers<[1], [0], [0], [1], [0, 0, 1, 1], [], []>} : vector<20x117xf32>, vector<117x80xf32>, vector<20x80xf32> -> vector<20x80xf32>
    %cst_39 = arith.constant 0.000000e+00 : f32
    %52 = vector.broadcast %cst_39 : f32 to vector<20x80xf32>
    %53 = arith.maximumf %51, %52 : vector<20x80xf32>
    %54 = vector.extract_strided_slice %53 {offsets = [0, 0], sizes = [10, 80], strides = [1, 1]} : vector<20x80xf32> to vector<10x80xf32>
    %c0_40 = arith.constant 0 : index
    %c0_41 = arith.constant 0 : index
    %c0_42 = arith.constant 0 : index
    %55 = vector.load %arg5[%c0_40, %c0_41, %c0_42] : memref<2x80x160xf32, #tpu.memory_space<vmem>>, vector<1x80x160xf32>
    %56 = vector.shape_cast %55 : vector<1x80x160xf32> to vector<80x160xf32>
    %cst_43 = arith.constant dense<0.000000e+00> : vector<10x160xf32>
    %57 = tpu.matmul %54, %56, %cst_43 {dimension_numbers = #tpu.dot_dimension_numbers<[1], [0], [0], [1], [0, 0, 1, 1], [], []>} : vector<10x80xf32>, vector<80x160xf32>, vector<10x160xf32> -> vector<10x160xf32>
    %58 = vector.extract_strided_slice %53 {offsets = [10, 0], sizes = [10, 80], strides = [1, 1]} : vector<20x80xf32> to vector<10x80xf32>
    %c1_44 = arith.constant 1 : index
    %c0_45 = arith.constant 0 : index
    %c0_46 = arith.constant 0 : index
    %59 = vector.load %arg5[%c1_44, %c0_45, %c0_46] : memref<2x80x160xf32, #tpu.memory_space<vmem>>, vector<1x80x160xf32>
    %60 = vector.shape_cast %59 : vector<1x80x160xf32> to vector<80x160xf32>
    %cst_47 = arith.constant dense<0.000000e+00> : vector<10x160xf32>
    %61 = tpu.matmul %58, %60, %cst_47 {dimension_numbers = #tpu.dot_dimension_numbers<[1], [0], [0], [1], [0, 0, 1, 1], [], []>} : vector<10x80xf32>, vector<80x160xf32>, vector<10x160xf32> -> vector<10x160xf32>
    %62 = arith.addf %57, %61 : vector<10x160xf32>
    %c0_48 = arith.constant 0 : index
    %c0_49 = arith.constant 0 : index
    %63 = vector.load %arg6[%c0_48, %c0_49] : memref<1x160xf32, #tpu.memory_space<vmem>>, vector<1x160xf32>
    %64 = vector.broadcast %63 : vector<1x160xf32> to vector<10x160xf32>
    %65 = arith.addf %62, %64 : vector<10x160xf32>
    %66 = vector.extract_strided_slice %65 {offsets = [0, 0], sizes = [9, 160], strides = [1, 1]} : vector<10x160xf32> to vector<9x160xf32>
    %67 = vector.extract_strided_slice %65 {offsets = [1, 0], sizes = [9, 160], strides = [1, 1]} : vector<10x160xf32> to vector<9x160xf32>
    %68 = arith.maximumf %66, %67 : vector<9x160xf32>
    %69 = vector.extract_strided_slice %68 {offsets = [0, 0], sizes = [8, 160], strides = [1, 1]} : vector<9x160xf32> to vector<8x160xf32>
    %70 = vector.extract_strided_slice %68 {offsets = [1, 0], sizes = [8, 160], strides = [1, 1]} : vector<9x160xf32> to vector<8x160xf32>
    %71 = arith.maximumf %69, %70 : vector<8x160xf32>
    %c0_50 = arith.constant 0 : index
    %c0_51 = arith.constant 0 : index
    %72 = vector.load %arg7[%c0_50, %c0_51] : memref<4x8xf32, #tpu.memory_space<vmem>>, vector<4x8xf32>
    %cst_52 = arith.constant dense<0.000000e+00> : vector<4x160xf32>
    %73 = tpu.matmul %72, %71, %cst_52 {dimension_numbers = #tpu.dot_dimension_numbers<[1], [0], [0], [1], [0, 0, 1, 1], [], []>} : vector<4x8xf32>, vector<8x160xf32>, vector<4x160xf32> -> vector<4x160xf32>
    %cst_53 = arith.constant 0.000000e+00 : f32
    %74 = vector.broadcast %cst_53 : f32 to vector<4x160xf32>
    %75 = arith.maximumf %73, %74 : vector<4x160xf32>
    %c0_54 = arith.constant 0 : index
    %c0_55 = arith.constant 0 : index
    %c0_56 = arith.constant 0 : index
    %76 = vector.load %arg8[%c0_54, %c0_55, %c0_56] : memref<1x4x160xf32, #tpu.memory_space<vmem>>, vector<1x4x160xf32>
    %77 = vector.shape_cast %76 : vector<1x4x160xf32> to vector<4x160xf32>
    %78 = vector.shape_cast %75 : vector<4x160xf32> to vector<1x4x160xf32>
    tpu.vector_store %arg8[%c0_54, %c0_55, %c0_56], %78 {strides = array<i32>} : memref<1x4x160xf32, #tpu.memory_space<vmem>>, vector<1x4x160xf32>,
    return
  }
  func.func @transform_0(%arg0: i32) -> (i32, i32, i32, i32) {
    %c0_i32 = arith.constant 0 : i32
    %c0_i32_0 = arith.constant 0 : i32
    %c0_i32_1 = arith.constant 0 : i32
    %c0_i32_2 = arith.constant 0 : i32
    return %arg0, %c0_i32, %c0_i32_0, %c0_i32_1 : i32, i32, i32, i32
  }
  func.func @transform_1(%arg0: i32) -> (i32, i32, i32) {
    %c0_i32 = arith.constant 0 : i32
    %c0_i32_0 = arith.constant 0 : i32
    %c0_i32_1 = arith.constant 0 : i32
    %c0_i32_2 = arith.constant 0 : i32
    return %c0_i32, %c0_i32_0, %c0_i32_1 : i32, i32, i32
  }
  func.func @transform_2(%arg0: i32) -> (i32, i32) {
    %c0_i32 = arith.constant 0 : i32
    %c0_i32_0 = arith.constant 0 : i32
    %c0_i32_1 = arith.constant 0 : i32
    return %c0_i32, %c0_i32_0 : i32, i32
  }
  func.func @transform_3(%arg0: i32) -> (i32, i32) {
    %c0_i32 = arith.constant 0 : i32
    %c0_i32_0 = arith.constant 0 : i32
    %c0_i32_1 = arith.constant 0 : i32
    return %c0_i32, %c0_i32_0 : i32, i32
  }
  func.func @transform_4(%arg0: i32) -> (i32, i32, i32) {
    %c0_i32 = arith.constant 0 : i32
    %c0_i32_0 = arith.constant 0 : i32
    %c0_i32_1 = arith.constant 0 : i32
    %c0_i32_2 = arith.constant 0 : i32
    return %c0_i32, %c0_i32_0, %c0_i32_1 : i32, i32, i32
  }
  func.func @transform_5(%arg0: i32) -> (i32, i32) {
    %c0_i32 = arith.constant 0 : i32
    %c0_i32_0 = arith.constant 0 : i32
    %c0_i32_1 = arith.constant 0 : i32
    return %c0_i32, %c0_i32_0 : i32, i32
  }
  func.func @transform_6(%arg0: i32) -> (i32, i32) {
    %c0_i32 = arith.constant 0 : i32
    %c0_i32_0 = arith.constant 0 : i32
    %c0_i32_1 = arith.constant 0 : i32
    return %c0_i32, %c0_i32_0 : i32, i32
  }
  func.func @transform_7(%arg0: i32) -> (i32, i32, i32) {
    %c0_i32 = arith.constant 0 : i32
    %c0_i32_0 = arith.constant 0 : i32
    %c0_i32_1 = arith.constant 0 : i32
    return %arg0, %c0_i32, %c0_i32_0 : i32, i32, i32
  }
}

</mosaic_0001>

<llo_original>
// kernel: ae_block_forward.1
$region0: #{ae_block_forward.1}
  #allocation0 [shape = 'u32[]', space=smem, size = 0x4, offset = 0x4, fixed_abs, tag = 'smem constant byte address 0x4 - core index']
  #allocation1 [shape = 'u32[72,128]{1,0:T(1,128)}', space=vmem, size = 0x9000, scoped, tag = 'internal scratch']
  %s0 = inlined_call_operand.vmem [shape: bf16[2,5,180,256], index: 0, kind: input, shape index: {}]
  %s1 = inlined_call_operand.vmem [shape: bf16[5,256,80], index: 1, kind: input, shape index: {}]
  %s2 = inlined_call_operand.vmem [shape: f32[1,80], index: 2, kind: input, shape index: {}]
  %s3 = inlined_call_operand.vmem [shape: f32[20,117], index: 3, kind: input, shape index: {}]
  %s4 = inlined_call_operand.vmem [shape: f32[2,80,160], index: 4, kind: input, shape index: {}]
  %s5 = inlined_call_operand.vmem [shape: f32[1,160], index: 5, kind: input, shape index: {}]
  %s6 = inlined_call_operand.vmem [shape: f32[4,8], index: 6, kind: input, shape index: {}]
  %s7 = inlined_call_operand.vmem [shape: f32[2,4,160], index: 7, kind: output, shape index: {}]
  %s8 = sld [smem:[#allocation0]]
  $region61: #{ae_block_forward.1} parent=0
    _
  %s10 = ssub.s32 1, %s8
  %s11 = scalar_select 0, %s10, %s8
  loop: start=0, step=1, limit=4
  $region2: #{ae_block_forward.1} parent=0 // loop_pre_header
    _
  $region3: #{ae_block_forward.1} parent=0 // loop_header
    %s13 = sphi 0, %s17
    %p14 = scmp.ge.s32.totalorder %s13, 4
    %s23 = sphi 0, %s25
    %s26 = sphi 0, %s23
    %s27 = sphi 0, %s26
    %s43 = sphi 0, %s27
    %s47 = sphi 0, %s47
    %s49 = sphi 0, %s47
    %s50 = sphi 0, %s49
    %s64 = sphi 0, %s50
    %s68 = sphi 0, %s68
    %s70 = sphi 0, %s68
    %s71 = sphi 0, %s70
    %s85 = sphi 0, %s71
    %s89 = sphi 0, %s89
    %s91 = sphi 0, %s89
    %s92 = sphi 0, %s91
    %s106 = sphi 0, %s92
    %s110 = sphi 0, %s110
    %s112 = sphi 0, %s110
    %s113 = sphi 0, %s112
    %s127 = sphi 0, %s113
    %s131 = sphi 0, %s131
    %s133 = sphi 0, %s131
    %s134 = sphi 0, %s133
    %s148 = sphi 0, %s134
    %s152 = sphi 0, %s152
    %s154 = sphi 0, %s152
    %s155 = sphi 0, %s154
    %s169 = sphi 0, %s155
    %s175 = sphi 0, %s177
    %s178 = sphi 0, %s175
    %s179 = sphi 0, %s178
    %s195 = sphi 0, %s179
  $region4: #{ae_block_forward.1} parent=0 // loop_header_branch
    %16 = sbr.rel (%p14) target = $region8
  $region5: #{ae_block_forward.1} parent=0 // loop_body
    %s18 = ssub.s32 %s13, 1
    %s19 = ssub.s32 %s13, 2
    %s20 = sadd.s32 %s13, 1
    %s21 = ssub.s32 %s13, %s20
    %p22 = scmp.eq.s32.totalorder %s21, 0
    %s24 = sadd.s32 %s23, 1
    %s25 = scalar_select %p22, %s23, %s24
    %p28 = pneg %p22
    %p29 = scmp.eq.s32.totalorder %s13, 1
    %p30 = por %p28, %p29
    %p31 = scmp.ne.s32.totalorder %s23, %s26
    %p32 = scmp.eq.s32.totalorder %s13, 0
    %p33 = por %p31, %p32
    %p34 = scmp.ne.s32.totalorder %s23, %s26
    %p35 = scmp.eq.s32.totalorder %s18, 1
    %p36 = por %p34, %p35
    %p37 = scmp.ne.s32.totalorder %s26, %s27
    %p38 = scmp.eq.s32.totalorder %s18, 0
    %p39 = por %p37, %p38
    %p40 = scmp.ne.s32.totalorder %s26, %s27
    %p41 = scmp.eq.s32.totalorder %s19, 1
    %p42 = por %p40, %p41
    %p44 = scmp.ne.s32.totalorder %s27, %s43
    %p45 = scmp.eq.s32.totalorder %s19, 0
    %p46 = por %p44, %p45
    %s48 = sadd.s32 %s47, 1
    %p51 = scmp.eq.s32.totalorder %s13, 1
    %p52 = scmp.ne.s32.totalorder %s47, %s49
    %p53 = scmp.eq.s32.totalorder %s13, 0
    %p54 = por %p52, %p53
    %p55 = scmp.ne.s32.totalorder %s47, %s49
    %p56 = scmp.eq.s32.totalorder %s18, 1
    %p57 = por %p55, %p56
    %p58 = scmp.ne.s32.totalorder %s49, %s50
    %p59 = scmp.eq.s32.totalorder %s18, 0
    %p60 = por %p58, %p59
    %p61 = scmp.ne.s32.totalorder %s49, %s50
    %p62 = scmp.eq.s32.totalorder %s19, 1
    %p63 = por %p61, %p62
    %p65 = scmp.ne.s32.totalorder %s50, %s64
    %p66 = scmp.eq.s32.totalorder %s19, 0
    %p67 = por %p65, %p66
    %s69 = sadd.s32 %s68, 1
    %p72 = scmp.eq.s32.totalorder %s13, 1
    %p73 = scmp.ne.s32.totalorder %s68, %s70
    %p74 = scmp.eq.s32.totalorder %s13, 0
    %p75 = por %p73, %p74
    %p76 = scmp.ne.s32.totalorder %s68, %s70
    %p77 = scmp.eq.s32.totalorder %s18, 1
    %p78 = por %p76, %p77
    %p79 = scmp.ne.s32.totalorder %s70, %s71
    %p80 = scmp.eq.s32.totalorder %s18, 0
    %p81 = por %p79, %p80
    %p82 = scmp.ne.s32.totalorder %s70, %s71
    %p83 = scmp.eq.s32.totalorder %s19, 1
    %p84 = por %p82, %p83
    %p86 = scmp.ne.s32.totalorder %s71, %s85
    %p87 = scmp.eq.s32.totalorder %s19, 0
    %p88 = por %p86, %p87
    %s90 = sadd.s32 %s89, 1
    %p93 = scmp.eq.s32.totalorder %s13, 1
    %p94 = scmp.ne.s32.totalorder %s89, %s91
    %p95 = scmp.eq.s32.totalorder %s13, 0
    %p96 = por %p94, %p95
    %p97 = scmp.ne.s32.totalorder %s89, %s91
    %p98 = scmp.eq.s32.totalorder %s18, 1
    %p99 = por %p97, %p98
    %p100 = scmp.ne.s32.totalorder %s91, %s92
    %p101 = scmp.eq.s32.totalorder %s18, 0
    %p102 = por %p100, %p101
    %p103 = scmp.ne.s32.totalorder %s91, %s92
    %p104 = scmp.eq.s32.totalorder %s19, 1
    %p105 = por %p103, %p104
    %p107 = scmp.ne.s32.totalorder %s92, %s106
    %p108 = scmp.eq.s32.totalorder %s19, 0
    %p109 = por %p107, %p108
    %s111 = sadd.s32 %s110, 1
    %p114 = scmp.eq.s32.totalorder %s13, 1
    %p115 = scmp.ne.s32.totalorder %s110, %s112
    %p116 = scmp.eq.s32.totalorder %s13, 0
    %p117 = por %p115, %p116
    %p118 = scmp.ne.s32.totalorder %s110, %s112
    %p119 = scmp.eq.s32.totalorder %s18, 1
    %p120 = por %p118, %p119
    %p121 = scmp.ne.s32.totalorder %s112, %s113
    %p122 = scmp.eq.s32.totalorder %s18, 0
    %p123 = por %p121, %p122
    %p124 = scmp.ne.s32.totalorder %s112, %s113
    %p125 = scmp.eq.s32.totalorder %s19, 1
    %p126 = por %p124, %p125
    %p128 = scmp.ne.s32.totalorder %s113, %s127
    %p129 = scmp.eq.s32.totalorder %s19, 0
    %p130 = por %p128, %p129
    %s132 = sadd.s32 %s131, 1
    %p135 = scmp.eq.s32.totalorder %s13, 1
    %p136 = scmp.ne.s32.totalorder %s131, %s133
    %p137 = scmp.eq.s32.totalorder %s13, 0
    %p138 = por %p136, %p137
    %p139 = scmp.ne.s32.totalorder %s131, %s133
    %p140 = scmp.eq.s32.totalorder %s18, 1
    %p141 = por %p139, %p140
    %p142 = scmp.ne.s32.totalorder %s133, %s134
    %p143 = scmp.eq.s32.totalorder %s18, 0
    %p144 = por %p142, %p143
    %p145 = scmp.ne.s32.totalorder %s133, %s134
    %p146 = scmp.eq.s32.totalorder %s19, 1
    %p147 = por %p145, %p146
    %p149 = scmp.ne.s32.totalorder %s134, %s148
    %p150 = scmp.eq.s32.totalorder %s19, 0
    %p151 = por %p149, %p150
    %s153 = sadd.s32 %s152, 1
    %p156 = scmp.eq.s32.totalorder %s13, 1
    %p157 = scmp.ne.s32.totalorder %s152, %s154
    %p158 = scmp.eq.s32.totalorder %s13, 0
    %p159 = por %p157, %p158
    %p160 = scmp.ne.s32.totalorder %s152, %s154
    %p161 = scmp.eq.s32.totalorder %s18, 1
    %p162 = por %p160, %p161
    %p163 = scmp.ne.s32.totalorder %s154, %s155
    %p164 = scmp.eq.s32.totalorder %s18, 0
    %p165 = por %p163, %p164
    %p166 = scmp.ne.s32.totalorder %s154, %s155
    %p167 = scmp.eq.s32.totalorder %s19, 1
    %p168 = por %p166, %p167
    %p170 = scmp.ne.s32.totalorder %s155, %s169
    %p171 = scmp.eq.s32.totalorder %s19, 0
    %p172 = por %p170, %p171
    %s173 = ssub.s32 %s13, %s20
    %p174 = scmp.eq.s32.totalorder %s173, 0
    %s176 = sadd.s32 %s175, 1
    %s177 = scalar_select %p174, %s175, %s176
    %p180 = pneg %p174
    %p181 = scmp.eq.s32.totalorder %s13, 1
    %p182 = por %p180, %p181
    %p183 = scmp.ne.s32.totalorder %s175, %s178
    %p184 = scmp.eq.s32.totalorder %s13, 0
    %p185 = por %p183, %p184
    %p186 = scmp.ne.s32.totalorder %s175, %s178
    %p187 = scmp.eq.s32.totalorder %s18, 1
    %p188 = por %p186, %p187
    %p189 = scmp.ne.s32.totalorder %s178, %s179
    %p190 = scmp.eq.s32.totalorder %s18, 0
    %p191 = por %p189, %p190
    %p192 = scmp.ne.s32.totalorder %s178, %s179
    %p193 = scmp.eq.s32.totalorder %s19, 1
    %p194 = por %p192, %p193
    %p196 = scmp.ne.s32.totalorder %s179, %s195
    %p197 = scmp.eq.s32.totalorder %s19, 0
    %p198 = por %p196, %p197
    %p199 = scmp.le.s32.totalorder 1, %s13
    %p200 = scmp.lt.s32.totalorder %s13, 3
    %p201 = pnand %p199, %p200
    %p202 = pneg %p201
    // Predicated region
    $region9: #{ae_block_forward.1} parent=5 // pred_check
      _
    $region10: #{ae_block_forward.1} parent=5 // pred_check_branch
      %204 = sbr.rel (%p201) target = $region12
    $region11: #{ae_block_forward.1} parent=5 // pred_region
      %s205 = ssub.s32 %s13, 1
      // Predicated region
      $region13: #{ae_block_forward.1} parent=11 // pred_check
        %p206 = pneg %p60
      $region14: #{ae_block_forward.1} parent=11 // pred_check_branch
        %208 = sbr.rel (%p206) target = $region16
      $region15: #{ae_block_forward.1} parent=11 // pred_region
        _
      $region16: #{ae_block_forward.1} parent=11 // pred_fallthru
        _
      // Predicated region
      $region17: #{ae_block_forward.1} parent=11 // pred_check
        %p209 = pneg %p81
      $region18: #{ae_block_forward.1} parent=11 // pred_check_branch
        %211 = sbr.rel (%p209) target = $region20
      $region19: #{ae_block_forward.1} parent=11 // pred_region
        _
      $region20: #{ae_block_forward.1} parent=11 // pred_fallthru
        _
      // Predicated region
      $region21: #{ae_block_forward.1} parent=11 // pred_check
        %p212 = pneg %p102
      $region22: #{ae_block_forward.1} parent=11 // pred_check_branch
        %214 = sbr.rel (%p212) target = $region24
      $region23: #{ae_block_forward.1} parent=11 // pred_region
        _
      $region24: #{ae_block_forward.1} parent=11 // pred_fallthru
        _
      // Predicated region
      $region25: #{ae_block_forward.1} parent=11 // pred_check
        %p215 = pneg %p123
      $region26: #{ae_block_forward.1} parent=11 // pred_check_branch
        %217 = sbr.rel (%p215) target = $region28
      $region27: #{ae_block_forward.1} parent=11 // pred_region
        _
      $region28: #{ae_block_forward.1} parent=11 // pred_fallthru
        _
      // Predicated region
      $region29: #{ae_block_forward.1} parent=11 // pred_check
        %p218 = pneg %p144
      $region30: #{ae_block_forward.1} parent=11 // pred_check_branch
        %220 = sbr.rel (%p218) target = $region32
      $region31: #{ae_block_forward.1} parent=11 // pred_region
        _
      $region32: #{ae_block_forward.1} parent=11 // pred_fallthru
        _
      // Predicated region
      $region33: #{ae_block_forward.1} parent=11 // pred_check
        %p221 = pneg %p165
      $region34: #{ae_block_forward.1} parent=11 // pred_check_branch
        %223 = sbr.rel (%p221) target = $region36
      $region35: #{ae_block_forward.1} parent=11 // pred_region
        _
      $region36: #{ae_block_forward.1} parent=11 // pred_fallthru
        _
    $region12: #{ae_block_forward.1} parent=5 // pred_fallthru
      _
    %p224 = scmp.lt.s32.totalorder %s13, 2
    // Predicated region
    $region37: #{ae_block_forward.1} parent=5 // pred_check
      %p225 = pneg %p224
    $region38: #{ae_block_forward.1} parent=5 // pred_check_branch
      %227 = sbr.rel (%p225) target = $region40
    $region39: #{ae_block_forward.1} parent=5 // pred_region
      // Predicated region
      $region41: #{ae_block_forward.1} parent=39 // pred_check
        %p228 = pneg %p33
      $region42: #{ae_block_forward.1} parent=39 // pred_check_branch
        %230 = sbr.rel (%p228) target = $region44
      $region43: #{ae_block_forward.1} parent=39 // pred_region
        %p231 = scmp.lt.s32.totalorder %s13, 1
        %s232 = scalar_select %p231, %s13, 1
        %s233 = smul.addr %s232, 230
        %s234 = smul.addr %s233, 4
        %s235 = scalar_lea.vmem %s0, %s234
      $region44: #{ae_block_forward.1} parent=39 // pred_fallthru
        _
    $region40: #{ae_block_forward.1} parent=5 // pred_fallthru
      _
    %p236 = scmp.le.s32.totalorder 1, %s13
    %p237 = scmp.lt.s32.totalorder %s13, 3
    %p238 = pnand %p236, %p237
    %p239 = pneg %p238
    // Predicated region
    $region45: #{ae_block_forward.1} parent=5 // pred_check
      _
    $region46: #{ae_block_forward.1} parent=5 // pred_check_branch
      %241 = sbr.rel (%p238) target = $region48
    $region47: #{ae_block_forward.1} parent=5 // pred_region
      %s242 = ssub.s32 %s13, 1
      %p243 = scmp.lt.s32.totalorder %s18, 1
      %s244 = scalar_select %p243, %s18, 1
      %s245 = smul.addr %s244, 230
      %s246 = smul.addr %s245, 4
      %s247 = scalar_lea.vmem %s0, %s246
      %p248 = pneg %p39
      %p249 = pneg %p36
      %p250 = pneg %p60
      %p251 = pneg %p57
      %p252 = pneg %p81
      %p253 = pneg %p78
      %p254 = pneg %p102
      %p255 = pneg %p99
      %p256 = pneg %p123
      %p257 = pneg %p120
      %p258 = pneg %p144
      %p259 = pneg %p141
      %p260 = pneg %p165
      %p261 = pneg %p162
      %p262 = pneg %p191
      %p263 = pneg %p188
      %p264 = scmp.lt.s32.totalorder %s18, 1
      %s265 = scalar_select %p264, %s18, 1
      %s266 = smul.addr %s265, 2
      %s267 = smul.addr %s266, 4
      %s268 = scalar_lea.vmem %s7, %s267
      %p269 = scmp.lt.s32.totalorder %s18, 1
      %s270 = scalar_select %p269, %s18, 1
      %s271 = smul.addr %s270, 230
      %s272 = smul.addr %s271, 4
      %s273 = scalar_lea.vmem %s0, %s272
      %p274 = scmp.lt.s32.totalorder %s18, 1
      %s275 = scalar_select %p274, %s18, 1
      %s276 = smul.addr %s275, 2
      %s277 = smul.addr %s276, 4
      %s278 = scalar_lea.vmem %s7, %s277
      %v279 = vld [vmem:[%s273] sm:$0xff]
      %v280 = vld [vmem:[%s273 + $0x8] sm:$0xff]
      %v281 = vld [vmem:[%s273 + $0x10] sm:$0xff]
      %v282 = vld [vmem:[%s273 + $0x18] sm:$0xff]
      %v283 = vld [vmem:[%s273 + $0x20] sm:$0xff]
      %v284 = vld [vmem:[%s273 + $0x28] sm:$0xff]
      %v285 = vld [vmem:[%s273 + $0x30] sm:$0xff]
      %v286 = vld [vmem:[%s273 + $0x38] sm:$0xff]
      %v287 = vld [vmem:[%s273 + $0x40] sm:$0xff]
      %v288 = vld [vmem:[%s273 + $0x48] sm:$0xff]
      %v289 = vld [vmem:[%s273 + $0x50] sm:$0xff]
      %v290 = vld [vmem:[%s273 + $0x58] sm:$0xff]
      %v291 = vld [vmem:[%s273 + $0x60] sm:$0xff]
      %v292 = vld [vmem:[%s273 + $0x68] sm:$0xff]
      %v293 = vld [vmem:[%s273 + $0x70] sm:$0xff]
      %v294 = vld [vmem:[%s273 + $0x78] sm:$0xff]
      %v295 = vld [vmem:[%s273 + $0x80] sm:$0xff]
      %v296 = vld [vmem:[%s273 + $0x88] sm:$0xff]
      %v297 = vld [vmem:[%s273 + $0x90] sm:$0xff]
      %v298 = vld [vmem:[%s273 + $0x98] sm:$0xff]
      %v299 = vld [vmem:[%s273 + $0xa0] sm:$0xff]
      %v300 = vld [vmem:[%s273 + $0xa8] sm:$0xff]
      %v301 = vld [vmem:[%s273 + $0xb0] sm:$0x33]
      %v302 = vld [vmem:[%s1] sm:$0xf]
      %v303 = vld [vmem:[%s1 + $0x4] sm:$0xf]
      %v304 = vld [vmem:[%s1 + $0x8] sm:$0xf]
      %v305 = vld [vmem:[%s1 + $0xc] sm:$0xf]
      %v306 = vld [vmem:[%s1 + $0x10] sm:$0xf]
      %v307 = vld [vmem:[%s1 + $0x14] sm:$0xf]
      %v308 = vld [vmem:[%s1 + $0x18] sm:$0xf]
      %v309 = vld [vmem:[%s1 + $0x1c] sm:$0xf]
      %v310 = vld [vmem:[%s1 + $0x20] sm:$0xf]
      %v311 = vld [vmem:[%s1 + $0x24] sm:$0xf]
      %v312 = vld [vmem:[%s1 + $0x28] sm:$0xf]
      %v313 = vld [vmem:[%s1 + $0x2c] sm:$0xf]
      %v314 = vld [vmem:[%s1 + $0x30] sm:$0xf]
      %v315 = vld [vmem:[%s1 + $0x34] sm:$0xf]
      %v316 = vld [vmem:[%s1 + $0x38] sm:$0xf]
      %v317 = vld [vmem:[%s1 + $0x3c] sm:$0xf]
      %v318 = vld [vmem:[%s1 + $0x40] sm:$0xf]
      %v319 = vld [vmem:[%s1 + $0x44] sm:$0xf]
      %v320 = vld [vmem:[%s1 + $0x48] sm:$0xf]
      %v321 = vld [vmem:[%s1 + $0x4c] sm:$0xf]
      %v322 = vld [vmem:[%s1 + $0x50] sm:$0xf]
      %v323 = vld [vmem:[%s1 + $0x54] sm:$0xf]
      %v324 = vld [vmem:[%s1 + $0x58] sm:$0xf]
      %v325 = vld [vmem:[%s1 + $0x5c] sm:$0xf]
      %v326 = vld [vmem:[%s1 + $0x60] sm:$0xf]
      %v327 = vld [vmem:[%s1 + $0x64] sm:$0xf]
      %v328 = vld [vmem:[%s1 + $0x68] sm:$0xf]
      %v329 = vld [vmem:[%s1 + $0x6c] sm:$0xf]
      %v330 = vld [vmem:[%s1 + $0x70] sm:$0xf]
      %v331 = vld [vmem:[%s1 + $0x74] sm:$0xf]
      %v332 = vld [vmem:[%s1 + $0x78] sm:$0xf]
      %v333 = vld [vmem:[%s1 + $0x7c] sm:$0xf]
      %s334 = scalar_lea.vmem %s273, 184
      %v335 = vld [vmem:[%s334] sm:$0xff]
      %v336 = vld [vmem:[%s334 + $0x8] sm:$0xff]
      %v337 = vld [vmem:[%s334 + $0x10] sm:$0xff]
      %v338 = vld [vmem:[%s334 + $0x18] sm:$0xff]
      %v339 = vld [vmem:[%s334 + $0x20] sm:$0xff]
      %v340 = vld [vmem:[%s334 + $0x28] sm:$0xff]
      %v341 = vld [vmem:[%s334 + $0x30] sm:$0xff]
      %v342 = vld [vmem:[%s334 + $0x38] sm:$0xff]
      %v343 = vld [vmem:[%s334 + $0x40] sm:$0xff]
      %v344 = vld [vmem:[%s334 + $0x48] sm:$0xff]
      %v345 = vld [vmem:[%s334 + $0x50] sm:$0xff]
      %v346 = vld [vmem:[%s334 + $0x58] sm:$0xff]
      %v347 = vld [vmem:[%s334 + $0x60] sm:$0xff]
      %v348 = vld [vmem:[%s334 + $0x68] sm:$0xff]
      %v349 = vld [vmem:[%s334 + $0x70] sm:$0xff]
      %v350 = vld [vmem:[%s334 + $0x78] sm:$0xff]
      %v351 = vld [vmem:[%s334 + $0x80] sm:$0xff]
      %v352 = vld [vmem:[%s334 + $0x88] sm:$0xff]
      %v353 = vld [vmem:[%s334 + $0x90] sm:$0xff]
      %v354 = vld [vmem:[%s334 + $0x98] sm:$0xff]
      %v355 = vld [vmem:[%s334 + $0xa0] sm:$0xff]
      %v356 = vld [vmem:[%s334 + $0xa8] sm:$0xff]
      %v357 = vld [vmem:[%s334 + $0xb0] sm:$0x33]
      %s358 = scalar_lea.vmem %s1, 128
      %v359 = vld [vmem:[%s358] sm:$0xf]
      %v360 = vld [vmem:[%s358 + $0x4] sm:$0xf]
      %v361 = vld [vmem:[%s358 + $0x8] sm:$0xf]
      %v362 = vld [vmem:[%s358 + $0xc] sm:$0xf]
      %v363 = vld [vmem:[%s358 + $0x10] sm:$0xf]
      %v364 = vld [vmem:[%s358 + $0x14] sm:$0xf]
      %v365 = vld [vmem:[%s358 + $0x18] sm:$0xf]
      %v366 = vld [vmem:[%s358 + $0x1c] sm:$0xf]
      %v367 = vld [vmem:[%s358 + $0x20] sm:$0xf]
      %v368 = vld [vmem:[%s358 + $0x24] sm:$0xf]
      %v369 = vld [vmem:[%s358 + $0x28] sm:$0xf]
      %v370 = vld [vmem:[%s358 + $0x2c] sm:$0xf]
      %v371 = vld [vmem:[%s358 + $0x30] sm:$0xf]
      %v372 = vld [vmem:[%s358 + $0x34] sm:$0xf]
      %v373 = vld [vmem:[%s358 + $0x38] sm:$0xf]
      %v374 = vld [vmem:[%s358 + $0x3c] sm:$0xf]
      %v375 = vld [vmem:[%s358 + $0x40] sm:$0xf]
      %v376 = vld [vmem:[%s358 + $0x44] sm:$0xf]
      %v377 = vld [vmem:[%s358 + $0x48] sm:$0xf]
      %v378 = vld [vmem:[%s358 + $0x4c] sm:$0xf]
      %v379 = vld [vmem:[%s358 + $0x50] sm:$0xf]
      %v380 = vld [vmem:[%s358 + $0x54] sm:$0xf]
      %v381 = vld [vmem:[%s358 + $0x58] sm:$0xf]
      %v382 = vld [vmem:[%s358 + $0x5c] sm:$0xf]
      %v383 = vld [vmem:[%s358 + $0x60] sm:$0xf]
      %v384 = vld [vmem:[%s358 + $0x64] sm:$0xf]
      %v385 = vld [vmem:[%s358 + $0x68] sm:$0xf]
      %v386 = vld [vmem:[%s358 + $0x6c] sm:$0xf]
      %v387 = vld [vmem:[%s358 + $0x70] sm:$0xf]
      %v388 = vld [vmem:[%s358 + $0x74] sm:$0xf]
      %v389 = vld [vmem:[%s358 + $0x78] sm:$0xf]
      %v390 = vld [vmem:[%s358 + $0x7c] sm:$0xf]
      %v414 = vunpack.c.l.b16 %v335
      %v415 = vunpack.c.h.b16 %v335
      %v416 = vunpack.c.l.b16 %v336
      %v417 = vunpack.c.h.b16 %v336
      %v418 = vunpack.c.l.b16 %v337
      %v419 = vunpack.c.h.b16 %v337
      %v420 = vunpack.c.l.b16 %v338
      %v421 = vunpack.c.h.b16 %v338
      %v422 = vunpack.c.l.b16 %v339
      %v423 = vunpack.c.h.b16 %v339
      %v424 = vunpack.c.l.b16 %v340
      %v425 = vunpack.c.h.b16 %v340
      %v426 = vunpack.c.l.b16 %v341
      %v427 = vunpack.c.h.b16 %v341
      %v428 = vunpack.c.l.b16 %v342
      %v429 = vunpack.c.h.b16 %v342
      %v430 = vunpack.c.l.b16 %v343
      %v431 = vunpack.c.h.b16 %v343
      %v432 = vunpack.c.l.b16 %v344
      %v433 = vunpack.c.h.b16 %v344
      %v434 = vunpack.c.l.b16 %v345
      %v435 = vunpack.c.h.b16 %v345
      %v436 = vunpack.c.l.b16 %v346
      %v437 = vunpack.c.h.b16 %v346
      %v438 = vunpack.c.l.b16 %v347
      %v439 = vunpack.c.h.b16 %v347
      %v440 = vunpack.c.l.b16 %v348
      %v441 = vunpack.c.h.b16 %v348
      %v442 = vunpack.c.l.b16 %v349
      %v443 = vunpack.c.h.b16 %v349
      %v444 = vunpack.c.l.b16 %v350
      %v445 = vunpack.c.h.b16 %v350
      %v446 = vunpack.c.l.b16 %v351
      %v447 = vunpack.c.h.b16 %v351
      %v448 = vunpack.c.l.b16 %v352
      %v449 = vunpack.c.h.b16 %v352
      %v450 = vunpack.c.l.b16 %v353
      %v451 = vunpack.c.h.b16 %v353
      %v452 = vunpack.c.l.b16 %v354
      %v453 = vunpack.c.h.b16 %v354
      %v454 = vunpack.c.l.b16 %v355
      %v455 = vunpack.c.h.b16 %v355
      %v456 = vunpack.c.l.b16 %v356
      %v457 = vunpack.c.h.b16 %v356
      %v458 = vunpack.c.l.b16 %v357
      %v459 = vunpack.c.h.b16 %v357
      %v460 = vpack.c.b16 %v416, %v414
      %v461 = vpack.c.b16 %v417, %v415
      %v462 = vpack.c.b16 %v420, %v418
      %v463 = vpack.c.b16 %v421, %v419
      %v464 = vpack.c.b16 %v424, %v422
      %v465 = vpack.c.b16 %v425, %v423
      %v466 = vpack.c.b16 %v428, %v426
      %v467 = vpack.c.b16 %v429, %v427
      %v468 = vpack.c.b16 %v432, %v430
      %v469 = vpack.c.b16 %v433, %v431
      %v470 = vpack.c.b16 %v436, %v434
      %v471 = vpack.c.b16 %v437, %v435
      %v472 = vpack.c.b16 %v440, %v438
      %v473 = vpack.c.b16 %v441, %v439
      %v474 = vpack.c.b16 %v444, %v442
      %v475 = vpack.c.b16 %v445, %v443
      %v476 = vpack.c.b16 %v448, %v446
      %v477 = vpack.c.b16 %v449, %v447
      %v478 = vpack.c.b16 %v452, %v450
      %v479 = vpack.c.b16 %v453, %v451
      %v480 = vpack.c.b16 %v456, %v454
      %v481 = vpack.c.b16 %v457, %v455
      %v482 = vpack.c.b16 %v458, %v458
      %v483 = vpack.c.b16 %v459, %v459
      %v540 = vunpack.c.l.b16 %v359
      %v541 = vunpack.c.l.b16 %v360
      %v542 = vunpack.c.l.b16 %v361
      %v543 = vunpack.c.l.b16 %v362
      %v544 = vunpack.c.l.b16 %v363
      %v545 = vunpack.c.l.b16 %v364
      %v546 = vunpack.c.l.b16 %v365
      %v547 = vunpack.c.l.b16 %v366
      %v548 = vunpack.c.l.b16 %v367
      %v549 = vunpack.c.l.b16 %v368
      %v550 = vunpack.c.l.b16 %v369
      %v551 = vunpack.c.l.b16 %v370
      %v552 = vunpack.c.l.b16 %v371
      %v553 = vunpack.c.l.b16 %v372
      %v554 = vunpack.c.l.b16 %v373
      %v555 = vunpack.c.l.b16 %v374
      %v556 = vunpack.c.l.b16 %v375
      %v557 = vunpack.c.l.b16 %v376
      %v558 = vunpack.c.l.b16 %v377
      %v559 = vunpack.c.l.b16 %v378
      %v560 = vunpack.c.l.b16 %v379
      %v561 = vunpack.c.l.b16 %v380
      %v562 = vunpack.c.l.b16 %v381
      %v563 = vunpack.c.l.b16 %v382
      %v564 = vunpack.c.l.b16 %v383
      %v565 = vunpack.c.l.b16 %v384
      %v566 = vunpack.c.l.b16 %v385
      %v567 = vunpack.c.l.b16 %v386
      %v568 = vunpack.c.l.b16 %v387
      %v569 = vunpack.c.l.b16 %v388
      %v570 = vunpack.c.l.b16 %v389
      %v571 = vunpack.c.l.b16 %v390
      %v572 = vpack.c.b16 %v541, %v540
      %v573 = vpack.c.b16 %v543, %v542
      %v574 = vpack.c.b16 %v545, %v544
      %v575 = vpack.c.b16 %v547, %v546
      %v576 = vpack.c.b16 %v549, %v548
      %v577 = vpack.c.b16 %v551, %v550
      %v578 = vpack.c.b16 %v553, %v552
      %v579 = vpack.c.b16 %v555, %v554
      %v580 = vpack.c.b16 %v557, %v556
      %v581 = vpack.c.b16 %v559, %v558
      %v582 = vpack.c.b16 %v561, %v560
      %v583 = vpack.c.b16 %v563, %v562
      %v584 = vpack.c.b16 %v565, %v564
      %v585 = vpack.c.b16 %v567, %v566
      %v586 = vpack.c.b16 %v569, %v568
      %v587 = vpack.c.b16 %v571, %v570
      %604 = vmatpush.bf16.msra.mxu0 %v579
      %605 = vmatpush.bf16.msra.mxu0 %v578
      %606 = vmatpush.bf16.msra.mxu0 %v577
      %607 = vmatpush.bf16.msra.mxu0 %v576
      %608 = vmatpush.bf16.msra.mxu0 %v575
      %609 = vmatpush.bf16.msra.mxu0 %v574
      %610 = vmatpush.bf16.msra.mxu0 %v573
      %611 = vmatpush.bf16.msra.mxu0 %v572
      %612 = vmatmul.bf16.gmra.mxu0 %v460
      %v613 = vpop.f32.mrf.mxu0
      %v614 = vadd.f32 0.0, %v613
      %v615 = vpop.f32.mrf.mxu0
      %v616 = vadd.f32 0.0, %v615
      %617 = vmatmul.bf16.gmra.mxu0 %v462
      %v618 = vpop.f32.mrf.mxu0
      %v619 = vadd.f32 0.0, %v618
      %v620 = vpop.f32.mrf.mxu0
      %v621 = vadd.f32 0.0, %v620
      %622 = vmatmul.bf16.gmra.mxu0 %v464
      %v623 = vpop.f32.mrf.mxu0
      %v624 = vadd.f32 0.0, %v623
      %v625 = vpop.f32.mrf.mxu0
      %v626 = vadd.f32 0.0, %v625
      %627 = vmatmul.bf16.gmra.mxu0 %v466
      %v628 = vpop.f32.mrf.mxu0
      %v629 = vadd.f32 0.0, %v628
      %v630 = vpop.f32.mrf.mxu0
      %v631 = vadd.f32 0.0, %v630
      %632 = vmatmul.bf16.gmra.mxu0 %v468
      %v633 = vpop.f32.mrf.mxu0
      %v634 = vadd.f32 0.0, %v633
      %v635 = vpop.f32.mrf.mxu0
      %v636 = vadd.f32 0.0, %v635
      %637 = vmatmul.bf16.gmra.mxu0 %v470
      %v638 = vpop.f32.mrf.mxu0
      %v639 = vadd.f32 0.0, %v638
      %v640 = vpop.f32.mrf.mxu0
      %v641 = vadd.f32 0.0, %v640
      %642 = vmatmul.bf16.gmra.mxu0 %v472
      %v643 = vpop.f32.mrf.mxu0
      %v644 = vadd.f32 0.0, %v643
      %v645 = vpop.f32.mrf.mxu0
      %v646 = vadd.f32 0.0, %v645
      %647 = vmatmul.bf16.gmra.mxu0 %v474
      %v648 = vpop.f32.mrf.mxu0
      %v649 = vadd.f32 0.0, %v648
      %v650 = vpop.f32.mrf.mxu0
      %v651 = vadd.f32 0.0, %v650
      %652 = vmatmul.bf16.gmra.mxu0 %v476
      %v653 = vpop.f32.mrf.mxu0
      %v654 = vadd.f32 0.0, %v653
      %v655 = vpop.f32.mrf.mxu0
      %v656 = vadd.f32 0.0, %v655
      %657 = vmatmul.bf16.gmra.mxu0 %v478
      %v658 = vpop.f32.mrf.mxu0
      %v659 = vadd.f32 0.0, %v658
      %v660 = vpop.f32.mrf.mxu0
      %v661 = vadd.f32 0.0, %v660
      %662 = vmatmul.bf16.gmra.mxu0 %v480
      %v663 = vpop.f32.mrf.mxu0
      %v664 = vadd.f32 0.0, %v663
      %v665 = vpop.f32.mrf.mxu0
      %v666 = vadd.f32 0.0, %v665
      %667 = vmatmul.bf16.gmra.mxu0 %v482
      %v668 = vpop.f32.mrf.mxu0
      %v669 = vadd.f32 0.0, %v668
      %v670 = vpop.f32.mrf.mxu0
      %671 = vdwg.mxu0
      %672 = vmatpush.bf16.msra.mxu0 %v587
      %673 = vmatpush.bf16.msra.mxu0 %v586
      %674 = vmatpush.bf16.msra.mxu0 %v585
      %675 = vmatpush.bf16.msra.mxu0 %v584
      %676 = vmatpush.bf16.msra.mxu0 %v583
      %677 = vmatpush.bf16.msra.mxu0 %v582
      %678 = vmatpush.bf16.msra.mxu0 %v581
      %679 = vmatpush.bf16.msra.mxu0 %v580
      %680 = vmatmul.bf16.gmra.mxu0 %v461
      %v681 = vpop.f32.mrf.mxu0
      %v682 = vadd.f32 %v614, %v681
      %v683 = vpop.f32.mrf.mxu0
      %v684 = vadd.f32 %v616, %v683
      %685 = vmatmul.bf16.gmra.mxu0 %v463
      %v686 = vpop.f32.mrf.mxu0
      %v687 = vadd.f32 %v619, %v686
      %v688 = vpop.f32.mrf.mxu0
      %v689 = vadd.f32 %v621, %v688
      %690 = vmatmul.bf16.gmra.mxu0 %v465
      %v691 = vpop.f32.mrf.mxu0
      %v692 = vadd.f32 %v624, %v691
      %v693 = vpop.f32.mrf.mxu0
      %v694 = vadd.f32 %v626, %v693
      %695 = vmatmul.bf16.gmra.mxu0 %v467
      %v696 = vpop.f32.mrf.mxu0
      %v697 = vadd.f32 %v629, %v696
      %v698 = vpop.f32.mrf.mxu0
      %v699 = vadd.f32 %v631, %v698
      %700 = vmatmul.bf16.gmra.mxu0 %v469
      %v701 = vpop.f32.mrf.mxu0
      %v702 = vadd.f32 %v634, %v701
      %v703 = vpop.f32.mrf.mxu0
      %v704 = vadd.f32 %v636, %v703
      %705 = vmatmul.bf16.gmra.mxu0 %v471
      %v706 = vpop.f32.mrf.mxu0
      %v707 = vadd.f32 %v639, %v706
      %v708 = vpop.f32.mrf.mxu0
      %v709 = vadd.f32 %v641, %v708
      %710 = vmatmul.bf16.gmra.mxu0 %v473
      %v711 = vpop.f32.mrf.mxu0
      %v712 = vadd.f32 %v644, %v711
      %v713 = vpop.f32.mrf.mxu0
      %v714 = vadd.f32 %v646, %v713
      %715 = vmatmul.bf16.gmra.mxu0 %v475
      %v716 = vpop.f32.mrf.mxu0
      %v717 = vadd.f32 %v649, %v716
      %v718 = vpop.f32.mrf.mxu0
      %v719 = vadd.f32 %v651, %v718
      %720 = vmatmul.bf16.gmra.mxu0 %v477
      %v721 = vpop.f32.mrf.mxu0
      %v722 = vadd.f32 %v654, %v721
      %v723 = vpop.f32.mrf.mxu0
      %v724 = vadd.f32 %v656, %v723
      %725 = vmatmul.bf16.gmra.mxu0 %v479
      %v726 = vpop.f32.mrf.mxu0
      %v727 = vadd.f32 %v659, %v726
      %v728 = vpop.f32.mrf.mxu0
      %v729 = vadd.f32 %v661, %v728
      %730 = vmatmul.bf16.gmra.mxu0 %v481
      %v731 = vpop.f32.mrf.mxu0
      %v732 = vadd.f32 %v664, %v731
      %v733 = vpop.f32.mrf.mxu0
      %v734 = vadd.f32 %v666, %v733
      %735 = vmatmul.bf16.gmra.mxu0 %v483
      %v736 = vpop.f32.mrf.mxu0
      %v737 = vadd.f32 %v669, %v736
      %v738 = vpop.f32.mrf.mxu0
      %739 = vdwg.mxu0
      %v763 = vunpack.c.l.b16 %v279
      %v764 = vunpack.c.h.b16 %v279
      %v765 = vunpack.c.l.b16 %v280
      %v766 = vunpack.c.h.b16 %v280
      %v767 = vunpack.c.l.b16 %v281
      %v768 = vunpack.c.h.b16 %v281
      %v769 = vunpack.c.l.b16 %v282
      %v770 = vunpack.c.h.b16 %v282
      %v771 = vunpack.c.l.b16 %v283
      %v772 = vunpack.c.h.b16 %v283
      %v773 = vunpack.c.l.b16 %v284
      %v774 = vunpack.c.h.b16 %v284
      %v775 = vunpack.c.l.b16 %v285
      %v776 = vunpack.c.h.b16 %v285
      %v777 = vunpack.c.l.b16 %v286
      %v778 = vunpack.c.h.b16 %v286
      %v779 = vunpack.c.l.b16 %v287
      %v780 = vunpack.c.h.b16 %v287
      %v781 = vunpack.c.l.b16 %v288
      %v782 = vunpack.c.h.b16 %v288
      %v783 = vunpack.c.l.b16 %v289
      %v784 = vunpack.c.h.b16 %v289
      %v785 = vunpack.c.l.b16 %v290
      %v786 = vunpack.c.h.b16 %v290
      %v787 = vunpack.c.l.b16 %v291
      %v788 = vunpack.c.h.b16 %v291
      %v789 = vunpack.c.l.b16 %v292
      %v790 = vunpack.c.h.b16 %v292
      %v791 = vunpack.c.l.b16 %v293
      %v792 = vunpack.c.h.b16 %v293
      %v793 = vunpack.c.l.b16 %v294
      %v794 = vunpack.c.h.b16 %v294
      %v795 = vunpack.c.l.b16 %v295
      %v796 = vunpack.c.h.b16 %v295
      %v797 = vunpack.c.l.b16 %v296
      %v798 = vunpack.c.h.b16 %v296
      %v799 = vunpack.c.l.b16 %v297
      %v800 = vunpack.c.h.b16 %v297
      %v801 = vunpack.c.l.b16 %v298
      %v802 = vunpack.c.h.b16 %v298
      %v803 = vunpack.c.l.b16 %v299
      %v804 = vunpack.c.h.b16 %v299
      %v805 = vunpack.c.l.b16 %v300
      %v806 = vunpack.c.h.b16 %v300
      %v807 = vunpack.c.l.b16 %v301
      %v808 = vunpack.c.h.b16 %v301
      %v809 = vpack.c.b16 %v765, %v763
      %v810 = vpack.c.b16 %v766, %v764
      %v811 = vpack.c.b16 %v769, %v767
      %v812 = vpack.c.b16 %v770, %v768
      %v813 = vpack.c.b16 %v773, %v771
      %v814 = vpack.c.b16 %v774, %v772
      %v815 = vpack.c.b16 %v777, %v775
      %v816 = vpack.c.b16 %v778, %v776
      %v817 = vpack.c.b16 %v781, %v779
      %v818 = vpack.c.b16 %v782, %v780
      %v819 = vpack.c.b16 %v785, %v783
      %v820 = vpack.c.b16 %v786, %v784
      %v821 = vpack.c.b16 %v789, %v787
      %v822 = vpack.c.b16 %v790, %v788
      %v823 = vpack.c.b16 %v793, %v791
      %v824 = vpack.c.b16 %v794, %v792
      %v825 = vpack.c.b16 %v797, %v795
      %v826 = vpack.c.b16 %v798, %v796
      %v827 = vpack.c.b16 %v801, %v799
      %v828 = vpack.c.b16 %v802, %v800
      %v829 = vpack.c.b16 %v805, %v803
      %v830 = vpack.c.b16 %v806, %v804
      %v831 = vpack.c.b16 %v807, %v807
      %v832 = vpack.c.b16 %v808, %v808
      %v889 = vunpack.c.l.b16 %v302
      %v890 = vunpack.c.l.b16 %v303
      %v891 = vunpack.c.l.b16 %v304
      %v892 = vunpack.c.l.b16 %v305
      %v893 = vunpack.c.l.b16 %v306
      %v894 = vunpack.c.l.b16 %v307
      %v895 = vunpack.c.l.b16 %v308
      %v896 = vunpack.c.l.b16 %v309
      %v897 = vunpack.c.l.b16 %v310
      %v898 = vunpack.c.l.b16 %v311
      %v899 = vunpack.c.l.b16 %v312
      %v900 = vunpack.c.l.b16 %v313
      %v901 = vunpack.c.l.b16 %v314
      %v902 = vunpack.c.l.b16 %v315
      %v903 = vunpack.c.l.b16 %v316
      %v904 = vunpack.c.l.b16 %v317
      %v905 = vunpack.c.l.b16 %v318
      %v906 = vunpack.c.l.b16 %v319
      %v907 = vunpack.c.l.b16 %v320
      %v908 = vunpack.c.l.b16 %v321
      %v909 = vunpack.c.l.b16 %v322
      %v910 = vunpack.c.l.b16 %v323
      %v911 = vunpack.c.l.b16 %v324
      %v912 = vunpack.c.l.b16 %v325
      %v913 = vunpack.c.l.b16 %v326
      %v914 = vunpack.c.l.b16 %v327
      %v915 = vunpack.c.l.b16 %v328
      %v916 = vunpack.c.l.b16 %v329
      %v917 = vunpack.c.l.b16 %v330
      %v918 = vunpack.c.l.b16 %v331
      %v919 = vunpack.c.l.b16 %v332
      %v920 = vunpack.c.l.b16 %v333
      %v921 = vpack.c.b16 %v890, %v889
      %v922 = vpack.c.b16 %v892, %v891
      %v923 = vpack.c.b16 %v894, %v893
      %v924 = vpack.c.b16 %v896, %v895
      %v925 = vpack.c.b16 %v898, %v897
      %v926 = vpack.c.b16 %v900, %v899
      %v927 = vpack.c.b16 %v902, %v901
      %v928 = vpack.c.b16 %v904, %v903
      %v929 = vpack.c.b16 %v906, %v905
      %v930 = vpack.c.b16 %v908, %v907
      %v931 = vpack.c.b16 %v910, %v909
      %v932 = vpack.c.b16 %v912, %v911
      %v933 = vpack.c.b16 %v914, %v913
      %v934 = vpack.c.b16 %v916, %v915
      %v935 = vpack.c.b16 %v918, %v917
      %v936 = vpack.c.b16 %v920, %v919
      %953 = vmatpush.bf16.msra.mxu0 %v928
      %954 = vmatpush.bf16.msra.mxu0 %v927
      %955 = vmatpush.bf16.msra.mxu0 %v926
      %956 = vmatpush.bf16.msra.mxu0 %v925
      %957 = vmatpush.bf16.msra.mxu0 %v924
      %958 = vmatpush.bf16.msra.mxu0 %v923
      %959 = vmatpush.bf16.msra.mxu0 %v922
      %960 = vmatpush.bf16.msra.mxu0 %v921
      %961 = vmatmul.bf16.gmra.mxu0 %v809
      %v962 = vpop.f32.mrf.mxu0
      %v963 = vadd.f32 %v682, %v962
      %v964 = vpop.f32.mrf.mxu0
      %v965 = vadd.f32 %v684, %v964
      %966 = vmatmul.bf16.gmra.mxu0 %v811
      %v967 = vpop.f32.mrf.mxu0
      %v968 = vadd.f32 %v687, %v967
      %v969 = vpop.f32.mrf.mxu0
      %v970 = vadd.f32 %v689, %v969
      %971 = vmatmul.bf16.gmra.mxu0 %v813
      %v972 = vpop.f32.mrf.mxu0
      %v973 = vadd.f32 %v692, %v972
      %v974 = vpop.f32.mrf.mxu0
      %v975 = vadd.f32 %v694, %v974
      %976 = vmatmul.bf16.gmra.mxu0 %v815
      %v977 = vpop.f32.mrf.mxu0
      %v978 = vadd.f32 %v697, %v977
      %v979 = vpop.f32.mrf.mxu0
      %v980 = vadd.f32 %v699, %v979
      %981 = vmatmul.bf16.gmra.mxu0 %v817
      %v982 = vpop.f32.mrf.mxu0
      %v983 = vadd.f32 %v702, %v982
      %v984 = vpop.f32.mrf.mxu0
      %v985 = vadd.f32 %v704, %v984
      %986 = vmatmul.bf16.gmra.mxu0 %v819
      %v987 = vpop.f32.mrf.mxu0
      %v988 = vadd.f32 %v707, %v987
      %v989 = vpop.f32.mrf.mxu0
      %v990 = vadd.f32 %v709, %v989
      %991 = vmatmul.bf16.gmra.mxu0 %v821
      %v992 = vpop.f32.mrf.mxu0
      %v993 = vadd.f32 %v712, %v992
      %v994 = vpop.f32.mrf.mxu0
      %v995 = vadd.f32 %v714, %v994
      %996 = vmatmul.bf16.gmra.mxu0 %v823
      %v997 = vpop.f32.mrf.mxu0
      %v998 = vadd.f32 %v717, %v997
      %v999 = vpop.f32.mrf.mxu0
      %v1000 = vadd.f32 %v719, %v999
      %1001 = vmatmul.bf16.gmra.mxu0 %v825
      %v1002 = vpop.f32.mrf.mxu0
      %v1003 = vadd.f32 %v722, %v1002
      %v1004 = vpop.f32.mrf.mxu0
      %v1005 = vadd.f32 %v724, %v1004
      %1006 = vmatmul.bf16.gmra.mxu0 %v827
      %v1007 = vpop.f32.mrf.mxu0
      %v1008 = vadd.f32 %v727, %v1007
      %v1009 = vpop.f32.mrf.mxu0
      %v1010 = vadd.f32 %v729, %v1009
      %1011 = vmatmul.bf16.gmra.mxu0 %v829
      %v1012 = vpop.f32.mrf.mxu0
      %v1013 = vadd.f32 %v732, %v1012
      %v1014 = vpop.f32.mrf.mxu0
      %v1015 = vadd.f32 %v734, %v1014
      %1016 = vmatmul.bf16.gmra.mxu0 %v831
      %v1017 = vpop.f32.mrf.mxu0
      %v1018 = vadd.f32 %v737, %v1017
      %v1019 = vpop.f32.mrf.mxu0
      %1020 = vdwg.mxu0
      %1021 = vmatpush.bf16.msra.mxu0 %v936
      %1022 = vmatpush.bf16.msra.mxu0 %v935
      %1023 = vmatpush.bf16.msra.mxu0 %v934
      %1024 = vmatpush.bf16.msra.mxu0 %v933
      %1025 = vmatpush.bf16.msra.mxu0 %v932
      %1026 = vmatpush.bf16.msra.mxu0 %v931
      %1027 = vmatpush.bf16.msra.mxu0 %v930
      %1028 = vmatpush.bf16.msra.mxu0 %v929
      %1029 = vmatmul.bf16.gmra.mxu0 %v810
      %v1030 = vpop.f32.mrf.mxu0
      %v1031 = vadd.f32 %v963, %v1030
      %v1032 = vpop.f32.mrf.mxu0
      %v1033 = vadd.f32 %v965, %v1032
      %1034 = vmatmul.bf16.gmra.mxu0 %v812
      %v1035 = vpop.f32.mrf.mxu0
      %v1036 = vadd.f32 %v968, %v1035
      %v1037 = vpop.f32.mrf.mxu0
      %v1038 = vadd.f32 %v970, %v1037
      %1039 = vmatmul.bf16.gmra.mxu0 %v814
      %v1040 = vpop.f32.mrf.mxu0
      %v1041 = vadd.f32 %v973, %v1040
      %v1042 = vpop.f32.mrf.mxu0
      %v1043 = vadd.f32 %v975, %v1042
      %1044 = vmatmul.bf16.gmra.mxu0 %v816
      %v1045 = vpop.f32.mrf.mxu0
      %v1046 = vadd.f32 %v978, %v1045
      %v1047 = vpop.f32.mrf.mxu0
      %v1048 = vadd.f32 %v980, %v1047
      %1049 = vmatmul.bf16.gmra.mxu0 %v818
      %v1050 = vpop.f32.mrf.mxu0
      %v1051 = vadd.f32 %v983, %v1050
      %v1052 = vpop.f32.mrf.mxu0
      %v1053 = vadd.f32 %v985, %v1052
      %1054 = vmatmul.bf16.gmra.mxu0 %v820
      %v1055 = vpop.f32.mrf.mxu0
      %v1056 = vadd.f32 %v988, %v1055
      %v1057 = vpop.f32.mrf.mxu0
      %v1058 = vadd.f32 %v990, %v1057
      %1059 = vmatmul.bf16.gmra.mxu0 %v822
      %v1060 = vpop.f32.mrf.mxu0
      %v1061 = vadd.f32 %v993, %v1060
      %v1062 = vpop.f32.mrf.mxu0
      %v1063 = vadd.f32 %v995, %v1062
      %1064 = vmatmul.bf16.gmra.mxu0 %v824
      %v1065 = vpop.f32.mrf.mxu0
      %v1066 = vadd.f32 %v998, %v1065
      %v1067 = vpop.f32.mrf.mxu0
      %v1068 = vadd.f32 %v1000, %v1067
      %1069 = vmatmul.bf16.gmra.mxu0 %v826
      %v1070 = vpop.f32.mrf.mxu0
      %v1071 = vadd.f32 %v1003, %v1070
      %v1072 = vpop.f32.mrf.mxu0
      %v1073 = vadd.f32 %v1005, %v1072
      %1074 = vmatmul.bf16.gmra.mxu0 %v828
      %v1075 = vpop.f32.mrf.mxu0
      %v1076 = vadd.f32 %v1008, %v1075
      %v1077 = vpop.f32.mrf.mxu0
      %v1078 = vadd.f32 %v1010, %v1077
      %1079 = vmatmul.bf16.gmra.mxu0 %v830
      %v1080 = vpop.f32.mrf.mxu0
      %v1081 = vadd.f32 %v1013, %v1080
      %v1082 = vpop.f32.mrf.mxu0
      %v1083 = vadd.f32 %v1015, %v1082
      %1084 = vmatmul.bf16.gmra.mxu0 %v832
      %v1085 = vpop.f32.mrf.mxu0
      %v1086 = vadd.f32 %v1018, %v1085
      %v1087 = vpop.f32.mrf.mxu0
      %1088 = vdwg.mxu0
      %s1089 = scalar_lea.vmem %s273, 368
      %v1090 = vld [vmem:[%s1089] sm:$0xff]
      %v1091 = vld [vmem:[%s1089 + $0x8] sm:$0xff]
      %v1092 = vld [vmem:[%s1089 + $0x10] sm:$0xff]
      %v1093 = vld [vmem:[%s1089 + $0x18] sm:$0xff]
      %v1094 = vld [vmem:[%s1089 + $0x20] sm:$0xff]
      %v1095 = vld [vmem:[%s1089 + $0x28] sm:$0xff]
      %v1096 = vld [vmem:[%s1089 + $0x30] sm:$0xff]
      %v1097 = vld [vmem:[%s1089 + $0x38] sm:$0xff]
      %v1098 = vld [vmem:[%s1089 + $0x40] sm:$0xff]
      %v1099 = vld [vmem:[%s1089 + $0x48] sm:$0xff]
      %v1100 = vld [vmem:[%s1089 + $0x50] sm:$0xff]
      %v1101 = vld [vmem:[%s1089 + $0x58] sm:$0xff]
      %v1102 = vld [vmem:[%s1089 + $0x60] sm:$0xff]
      %v1103 = vld [vmem:[%s1089 + $0x68] sm:$0xff]
      %v1104 = vld [vmem:[%s1089 + $0x70] sm:$0xff]
      %v1105 = vld [vmem:[%s1089 + $0x78] sm:$0xff]
      %v1106 = vld [vmem:[%s1089 + $0x80] sm:$0xff]
      %v1107 = vld [vmem:[%s1089 + $0x88] sm:$0xff]
      %v1108 = vld [vmem:[%s1089 + $0x90] sm:$0xff]
      %v1109 = vld [vmem:[%s1089 + $0x98] sm:$0xff]
      %v1110 = vld [vmem:[%s1089 + $0xa0] sm:$0xff]
      %v1111 = vld [vmem:[%s1089 + $0xa8] sm:$0xff]
      %v1112 = vld [vmem:[%s1089 + $0xb0] sm:$0x33]
      %s1113 = scalar_lea.vmem %s1, 256
      %v1114 = vld [vmem:[%s1113] sm:$0xf]
      %v1115 = vld [vmem:[%s1113 + $0x4] sm:$0xf]
      %v1116 = vld [vmem:[%s1113 + $0x8] sm:$0xf]
      %v1117 = vld [vmem:[%s1113 + $0xc] sm:$0xf]
      %v1118 = vld [vmem:[%s1113 + $0x10] sm:$0xf]
      %v1119 = vld [vmem:[%s1113 + $0x14] sm:$0xf]
      %v1120 = vld [vmem:[%s1113 + $0x18] sm:$0xf]
      %v1121 = vld [vmem:[%s1113 + $0x1c] sm:$0xf]
      %v1122 = vld [vmem:[%s1113 + $0x20] sm:$0xf]
      %v1123 = vld [vmem:[%s1113 + $0x24] sm:$0xf]
      %v1124 = vld [vmem:[%s1113 + $0x28] sm:$0xf]
      %v1125 = vld [vmem:[%s1113 + $0x2c] sm:$0xf]
      %v1126 = vld [vmem:[%s1113 + $0x30] sm:$0xf]
      %v1127 = vld [vmem:[%s1113 + $0x34] sm:$0xf]
      %v1128 = vld [vmem:[%s1113 + $0x38] sm:$0xf]
      %v1129 = vld [vmem:[%s1113 + $0x3c] sm:$0xf]
      %v1130 = vld [vmem:[%s1113 + $0x40] sm:$0xf]
      %v1131 = vld [vmem:[%s1113 + $0x44] sm:$0xf]
      %v1132 = vld [vmem:[%s1113 + $0x48] sm:$0xf]
      %v1133 = vld [vmem:[%s1113 + $0x4c] sm:$0xf]
      %v1134 = vld [vmem:[%s1113 + $0x50] sm:$0xf]
      %v1135 = vld [vmem:[%s1113 + $0x54] sm:$0xf]
      %v1136 = vld [vmem:[%s1113 + $0x58] sm:$0xf]
      %v1137 = vld [vmem:[%s1113 + $0x5c] sm:$0xf]
      %v1138 = vld [vmem:[%s1113 + $0x60] sm:$0xf]
      %v1139 = vld [vmem:[%s1113 + $0x64] sm:$0xf]
      %v1140 = vld [vmem:[%s1113 + $0x68] sm:$0xf]
      %v1141 = vld [vmem:[%s1113 + $0x6c] sm:$0xf]
      %v1142 = vld [vmem:[%s1113 + $0x70] sm:$0xf]
      %v1143 = vld [vmem:[%s1113 + $0x74] sm:$0xf]
      %v1144 = vld [vmem:[%s1113 + $0x78] sm:$0xf]
      %v1145 = vld [vmem:[%s1113 + $0x7c] sm:$0xf]
      %v1169 = vunpack.c.l.b16 %v1090
      %v1170 = vunpack.c.h.b16 %v1090
      %v1171 = vunpack.c.l.b16 %v1091
      %v1172 = vunpack.c.h.b16 %v1091
      %v1173 = vunpack.c.l.b16 %v1092
      %v1174 = vunpack.c.h.b16 %v1092
      %v1175 = vunpack.c.l.b16 %v1093
      %v1176 = vunpack.c.h.b16 %v1093
      %v1177 = vunpack.c.l.b16 %v1094
      %v1178 = vunpack.c.h.b16 %v1094
      %v1179 = vunpack.c.l.b16 %v1095
      %v1180 = vunpack.c.h.b16 %v1095
      %v1181 = vunpack.c.l.b16 %v1096
      %v1182 = vunpack.c.h.b16 %v1096
      %v1183 = vunpack.c.l.b16 %v1097
      %v1184 = vunpack.c.h.b16 %v1097
      %v1185 = vunpack.c.l.b16 %v1098
      %v1186 = vunpack.c.h.b16 %v1098
      %v1187 = vunpack.c.l.b16 %v1099
      %v1188 = vunpack.c.h.b16 %v1099
      %v1189 = vunpack.c.l.b16 %v1100
      %v1190 = vunpack.c.h.b16 %v1100
      %v1191 = vunpack.c.l.b16 %v1101
      %v1192 = vunpack.c.h.b16 %v1101
      %v1193 = vunpack.c.l.b16 %v1102
      %v1194 = vunpack.c.h.b16 %v1102
      %v1195 = vunpack.c.l.b16 %v1103
      %v1196 = vunpack.c.h.b16 %v1103
      %v1197 = vunpack.c.l.b16 %v1104
      %v1198 = vunpack.c.h.b16 %v1104
      %v1199 = vunpack.c.l.b16 %v1105
      %v1200 = vunpack.c.h.b16 %v1105
      %v1201 = vunpack.c.l.b16 %v1106
      %v1202 = vunpack.c.h.b16 %v1106
      %v1203 = vunpack.c.l.b16 %v1107
      %v1204 = vunpack.c.h.b16 %v1107
      %v1205 = vunpack.c.l.b16 %v1108
      %v1206 = vunpack.c.h.b16 %v1108
      %v1207 = vunpack.c.l.b16 %v1109
      %v1208 = vunpack.c.h.b16 %v1109
      %v1209 = vunpack.c.l.b16 %v1110
      %v1210 = vunpack.c.h.b16 %v1110
      %v1211 = vunpack.c.l.b16 %v1111
      %v1212 = vunpack.c.h.b16 %v1111
      %v1213 = vunpack.c.l.b16 %v1112
      %v1214 = vunpack.c.h.b16 %v1112
      %v1215 = vpack.c.b16 %v1171, %v1169
      %v1216 = vpack.c.b16 %v1172, %v1170
      %v1217 = vpack.c.b16 %v1175, %v1173
      %v1218 = vpack.c.b16 %v1176, %v1174
      %v1219 = vpack.c.b16 %v1179, %v1177
      %v1220 = vpack.c.b16 %v1180, %v1178
      %v1221 = vpack.c.b16 %v1183, %v1181
      %v1222 = vpack.c.b16 %v1184, %v1182
      %v1223 = vpack.c.b16 %v1187, %v1185
      %v1224 = vpack.c.b16 %v1188, %v1186
      %v1225 = vpack.c.b16 %v1191, %v1189
      %v1226 = vpack.c.b16 %v1192, %v1190
      %v1227 = vpack.c.b16 %v1195, %v1193
      %v1228 = vpack.c.b16 %v1196, %v1194
      %v1229 = vpack.c.b16 %v1199, %v1197
      %v1230 = vpack.c.b16 %v1200, %v1198
      %v1231 = vpack.c.b16 %v1203, %v1201
      %v1232 = vpack.c.b16 %v1204, %v1202
      %v1233 = vpack.c.b16 %v1207, %v1205
      %v1234 = vpack.c.b16 %v1208, %v1206
      %v1235 = vpack.c.b16 %v1211, %v1209
      %v1236 = vpack.c.b16 %v1212, %v1210
      %v1237 = vpack.c.b16 %v1213, %v1213
      %v1238 = vpack.c.b16 %v1214, %v1214
      %v1295 = vunpack.c.l.b16 %v1114
      %v1296 = vunpack.c.l.b16 %v1115
      %v1297 = vunpack.c.l.b16 %v1116
      %v1298 = vunpack.c.l.b16 %v1117
      %v1299 = vunpack.c.l.b16 %v1118
      %v1300 = vunpack.c.l.b16 %v1119
      %v1301 = vunpack.c.l.b16 %v1120
      %v1302 = vunpack.c.l.b16 %v1121
      %v1303 = vunpack.c.l.b16 %v1122
      %v1304 = vunpack.c.l.b16 %v1123
      %v1305 = vunpack.c.l.b16 %v1124
      %v1306 = vunpack.c.l.b16 %v1125
      %v1307 = vunpack.c.l.b16 %v1126
      %v1308 = vunpack.c.l.b16 %v1127
      %v1309 = vunpack.c.l.b16 %v1128
      %v1310 = vunpack.c.l.b16 %v1129
      %v1311 = vunpack.c.l.b16 %v1130
      %v1312 = vunpack.c.l.b16 %v1131
      %v1313 = vunpack.c.l.b16 %v1132
      %v1314 = vunpack.c.l.b16 %v1133
      %v1315 = vunpack.c.l.b16 %v1134
      %v1316 = vunpack.c.l.b16 %v1135
      %v1317 = vunpack.c.l.b16 %v1136
      %v1318 = vunpack.c.l.b16 %v1137
      %v1319 = vunpack.c.l.b16 %v1138
      %v1320 = vunpack.c.l.b16 %v1139
      %v1321 = vunpack.c.l.b16 %v1140
      %v1322 = vunpack.c.l.b16 %v1141
      %v1323 = vunpack.c.l.b16 %v1142
      %v1324 = vunpack.c.l.b16 %v1143
      %v1325 = vunpack.c.l.b16 %v1144
      %v1326 = vunpack.c.l.b16 %v1145
      %v1327 = vpack.c.b16 %v1296, %v1295
      %v1328 = vpack.c.b16 %v1298, %v1297
      %v1329 = vpack.c.b16 %v1300, %v1299
      %v1330 = vpack.c.b16 %v1302, %v1301
      %v1331 = vpack.c.b16 %v1304, %v1303
      %v1332 = vpack.c.b16 %v1306, %v1305
      %v1333 = vpack.c.b16 %v1308, %v1307
      %v1334 = vpack.c.b16 %v1310, %v1309
      %v1335 = vpack.c.b16 %v1312, %v1311
      %v1336 = vpack.c.b16 %v1314, %v1313
      %v1337 = vpack.c.b16 %v1316, %v1315
      %v1338 = vpack.c.b16 %v1318, %v1317
      %v1339 = vpack.c.b16 %v1320, %v1319
      %v1340 = vpack.c.b16 %v1322, %v1321
      %v1341 = vpack.c.b16 %v1324, %v1323
      %v1342 = vpack.c.b16 %v1326, %v1325
      %1359 = vmatpush.bf16.msra.mxu0 %v1334
      %1360 = vmatpush.bf16.msra.mxu0 %v1333
      %1361 = vmatpush.bf16.msra.mxu0 %v1332
      %1362 = vmatpush.bf16.msra.mxu0 %v1331
      %1363 = vmatpush.bf16.msra.mxu0 %v1330
      %1364 = vmatpush.bf16.msra.mxu0 %v1329
      %1365 = vmatpush.bf16.msra.mxu0 %v1328
      %1366 = vmatpush.bf16.msra.mxu0 %v1327
      %1367 = vmatmul.bf16.gmra.mxu0 %v1215
      %v1368 = vpop.f32.mrf.mxu0
      %v1369 = vadd.f32 0.0, %v1368
      %v1370 = vpop.f32.mrf.mxu0
      %v1371 = vadd.f32 0.0, %v1370
      %1372 = vmatmul.bf16.gmra.mxu0 %v1217
      %v1373 = vpop.f32.mrf.mxu0
      %v1374 = vadd.f32 0.0, %v1373
      %v1375 = vpop.f32.mrf.mxu0
      %v1376 = vadd.f32 0.0, %v1375
      %1377 = vmatmul.bf16.gmra.mxu0 %v1219
      %v1378 = vpop.f32.mrf.mxu0
      %v1379 = vadd.f32 0.0, %v1378
      %v1380 = vpop.f32.mrf.mxu0
      %v1381 = vadd.f32 0.0, %v1380
      %1382 = vmatmul.bf16.gmra.mxu0 %v1221
      %v1383 = vpop.f32.mrf.mxu0
      %v1384 = vadd.f32 0.0, %v1383
      %v1385 = vpop.f32.mrf.mxu0
      %v1386 = vadd.f32 0.0, %v1385
      %1387 = vmatmul.bf16.gmra.mxu0 %v1223
      %v1388 = vpop.f32.mrf.mxu0
      %v1389 = vadd.f32 0.0, %v1388
      %v1390 = vpop.f32.mrf.mxu0
      %v1391 = vadd.f32 0.0, %v1390
      %1392 = vmatmul.bf16.gmra.mxu0 %v1225
      %v1393 = vpop.f32.mrf.mxu0
      %v1394 = vadd.f32 0.0, %v1393
      %v1395 = vpop.f32.mrf.mxu0
      %v1396 = vadd.f32 0.0, %v1395
      %1397 = vmatmul.bf16.gmra.mxu0 %v1227
      %v1398 = vpop.f32.mrf.mxu0
      %v1399 = vadd.f32 0.0, %v1398
      %v1400 = vpop.f32.mrf.mxu0
      %v1401 = vadd.f32 0.0, %v1400
      %1402 = vmatmul.bf16.gmra.mxu0 %v1229
      %v1403 = vpop.f32.mrf.mxu0
      %v1404 = vadd.f32 0.0, %v1403
      %v1405 = vpop.f32.mrf.mxu0
      %v1406 = vadd.f32 0.0, %v1405
      %1407 = vmatmul.bf16.gmra.mxu0 %v1231
      %v1408 = vpop.f32.mrf.mxu0
      %v1409 = vadd.f32 0.0, %v1408
      %v1410 = vpop.f32.mrf.mxu0
      %v1411 = vadd.f32 0.0, %v1410
      %1412 = vmatmul.bf16.gmra.mxu0 %v1233
      %v1413 = vpop.f32.mrf.mxu0
      %v1414 = vadd.f32 0.0, %v1413
      %v1415 = vpop.f32.mrf.mxu0
      %v1416 = vadd.f32 0.0, %v1415
      %1417 = vmatmul.bf16.gmra.mxu0 %v1235
      %v1418 = vpop.f32.mrf.mxu0
      %v1419 = vadd.f32 0.0, %v1418
      %v1420 = vpop.f32.mrf.mxu0
      %v1421 = vadd.f32 0.0, %v1420
      %1422 = vmatmul.bf16.gmra.mxu0 %v1237
      %v1423 = vpop.f32.mrf.mxu0
      %v1424 = vadd.f32 0.0, %v1423
      %v1425 = vpop.f32.mrf.mxu0
      %1426 = vdwg.mxu0
      %1427 = vmatpush.bf16.msra.mxu0 %v1342
      %1428 = vmatpush.bf16.msra.mxu0 %v1341
      %1429 = vmatpush.bf16.msra.mxu0 %v1340
      %1430 = vmatpush.bf16.msra.mxu0 %v1339
      %1431 = vmatpush.bf16.msra.mxu0 %v1338
      %1432 = vmatpush.bf16.msra.mxu0 %v1337
      %1433 = vmatpush.bf16.msra.mxu0 %v1336
      %1434 = vmatpush.bf16.msra.mxu0 %v1335
      %1435 = vmatmul.bf16.gmra.mxu0 %v1216
      %v1436 = vpop.f32.mrf.mxu0
      %v1437 = vadd.f32 %v1369, %v1436
      %v1438 = vpop.f32.mrf.mxu0
      %v1439 = vadd.f32 %v1371, %v1438
      %1440 = vmatmul.bf16.gmra.mxu0 %v1218
      %v1441 = vpop.f32.mrf.mxu0
      %v1442 = vadd.f32 %v1374, %v1441
      %v1443 = vpop.f32.mrf.mxu0
      %v1444 = vadd.f32 %v1376, %v1443
      %1445 = vmatmul.bf16.gmra.mxu0 %v1220
      %v1446 = vpop.f32.mrf.mxu0
      %v1447 = vadd.f32 %v1379, %v1446
      %v1448 = vpop.f32.mrf.mxu0
      %v1449 = vadd.f32 %v1381, %v1448
      %1450 = vmatmul.bf16.gmra.mxu0 %v1222
      %v1451 = vpop.f32.mrf.mxu0
      %v1452 = vadd.f32 %v1384, %v1451
      %v1453 = vpop.f32.mrf.mxu0
      %v1454 = vadd.f32 %v1386, %v1453
      %1455 = vmatmul.bf16.gmra.mxu0 %v1224
      %v1456 = vpop.f32.mrf.mxu0
      %v1457 = vadd.f32 %v1389, %v1456
      %v1458 = vpop.f32.mrf.mxu0
      %v1459 = vadd.f32 %v1391, %v1458
      %1460 = vmatmul.bf16.gmra.mxu0 %v1226
      %v1461 = vpop.f32.mrf.mxu0
      %v1462 = vadd.f32 %v1394, %v1461
      %v1463 = vpop.f32.mrf.mxu0
      %v1464 = vadd.f32 %v1396, %v1463
      %1465 = vmatmul.bf16.gmra.mxu0 %v1228
      %v1466 = vpop.f32.mrf.mxu0
      %v1467 = vadd.f32 %v1399, %v1466
      %v1468 = vpop.f32.mrf.mxu0
      %v1469 = vadd.f32 %v1401, %v1468
      %1470 = vmatmul.bf16.gmra.mxu0 %v1230
      %v1471 = vpop.f32.mrf.mxu0
      %v1472 = vadd.f32 %v1404, %v1471
      %v1473 = vpop.f32.mrf.mxu0
      %v1474 = vadd.f32 %v1406, %v1473
      %1475 = vmatmul.bf16.gmra.mxu0 %v1232
      %v1476 = vpop.f32.mrf.mxu0
      %v1477 = vadd.f32 %v1409, %v1476
      %v1478 = vpop.f32.mrf.mxu0
      %v1479 = vadd.f32 %v1411, %v1478
      %1480 = vmatmul.bf16.gmra.mxu0 %v1234
      %v1481 = vpop.f32.mrf.mxu0
      %v1482 = vadd.f32 %v1414, %v1481
      %v1483 = vpop.f32.mrf.mxu0
      %v1484 = vadd.f32 %v1416, %v1483
      %1485 = vmatmul.bf16.gmra.mxu0 %v1236
      %v1486 = vpop.f32.mrf.mxu0
      %v1487 = vadd.f32 %v1419, %v1486
      %v1488 = vpop.f32.mrf.mxu0
      %v1489 = vadd.f32 %v1421, %v1488
      %1490 = vmatmul.bf16.gmra.mxu0 %v1238
      %v1491 = vpop.f32.mrf.mxu0
      %v1492 = vadd.f32 %v1424, %v1491
      %v1493 = vpop.f32.mrf.mxu0
      %1494 = vdwg.mxu0
      %v1495 = vadd.f32 %v1031, %v1437
      %v1496 = vadd.f32 %v1033, %v1439
      %v1497 = vadd.f32 %v1036, %v1442
      %v1498 = vadd.f32 %v1038, %v1444
      %v1499 = vadd.f32 %v1041, %v1447
      %v1500 = vadd.f32 %v1043, %v1449
      %v1501 = vadd.f32 %v1046, %v1452
      %v1502 = vadd.f32 %v1048, %v1454
      %v1503 = vadd.f32 %v1051, %v1457
      %v1504 = vadd.f32 %v1053, %v1459
      %v1505 = vadd.f32 %v1056, %v1462
      %v1506 = vadd.f32 %v1058, %v1464
      %v1507 = vadd.f32 %v1061, %v1467
      %v1508 = vadd.f32 %v1063, %v1469
      %v1509 = vadd.f32 %v1066, %v1472
      %v1510 = vadd.f32 %v1068, %v1474
      %v1511 = vadd.f32 %v1071, %v1477
      %v1512 = vadd.f32 %v1073, %v1479
      %v1513 = vadd.f32 %v1076, %v1482
      %v1514 = vadd.f32 %v1078, %v1484
      %v1515 = vadd.f32 %v1081, %v1487
      %v1516 = vadd.f32 %v1083, %v1489
      %v1517 = vadd.f32 %v1086, %v1492
      %s1518 = scalar_lea.vmem %s273, 552
      %v1519 = vld [vmem:[%s1518] sm:$0xff]
      %v1520 = vld [vmem:[%s1518 + $0x8] sm:$0xff]
      %v1521 = vld [vmem:[%s1518 + $0x10] sm:$0xff]
      %v1522 = vld [vmem:[%s1518 + $0x18] sm:$0xff]
      %v1523 = vld [vmem:[%s1518 + $0x20] sm:$0xff]
      %v1524 = vld [vmem:[%s1518 + $0x28] sm:$0xff]
      %v1525 = vld [vmem:[%s1518 + $0x30] sm:$0xff]
      %v1526 = vld [vmem:[%s1518 + $0x38] sm:$0xff]
      %v1527 = vld [vmem:[%s1518 + $0x40] sm:$0xff]
      %v1528 = vld [vmem:[%s1518 + $0x48] sm:$0xff]
      %v1529 = vld [vmem:[%s1518 + $0x50] sm:$0xff]
      %v1530 = vld [vmem:[%s1518 + $0x58] sm:$0xff]
      %v1531 = vld [vmem:[%s1518 + $0x60] sm:$0xff]
      %v1532 = vld [vmem:[%s1518 + $0x68] sm:$0xff]
      %v1533 = vld [vmem:[%s1518 + $0x70] sm:$0xff]
      %v1534 = vld [vmem:[%s1518 + $0x78] sm:$0xff]
      %v1535 = vld [vmem:[%s1518 + $0x80] sm:$0xff]
      %v1536 = vld [vmem:[%s1518 + $0x88] sm:$0xff]
      %v1537 = vld [vmem:[%s1518 + $0x90] sm:$0xff]
      %v1538 = vld [vmem:[%s1518 + $0x98] sm:$0xff]
      %v1539 = vld [vmem:[%s1518 + $0xa0] sm:$0xff]
      %v1540 = vld [vmem:[%s1518 + $0xa8] sm:$0xff]
      %v1541 = vld [vmem:[%s1518 + $0xb0] sm:$0x33]
      %s1542 = scalar_lea.vmem %s1, 384
      %v1543 = vld [vmem:[%s1542] sm:$0xf]
      %v1544 = vld [vmem:[%s1542 + $0x4] sm:$0xf]
      %v1545 = vld [vmem:[%s1542 + $0x8] sm:$0xf]
      %v1546 = vld [vmem:[%s1542 + $0xc] sm:$0xf]
      %v1547 = vld [vmem:[%s1542 + $0x10] sm:$0xf]
      %v1548 = vld [vmem:[%s1542 + $0x14] sm:$0xf]
      %v1549 = vld [vmem:[%s1542 + $0x18] sm:$0xf]
      %v1550 = vld [vmem:[%s1542 + $0x1c] sm:$0xf]
      %v1551 = vld [vmem:[%s1542 + $0x20] sm:$0xf]
      %v1552 = vld [vmem:[%s1542 + $0x24] sm:$0xf]
      %v1553 = vld [vmem:[%s1542 + $0x28] sm:$0xf]
      %v1554 = vld [vmem:[%s1542 + $0x2c] sm:$0xf]
      %v1555 = vld [vmem:[%s1542 + $0x30] sm:$0xf]
      %v1556 = vld [vmem:[%s1542 + $0x34] sm:$0xf]
      %v1557 = vld [vmem:[%s1542 + $0x38] sm:$0xf]
      %v1558 = vld [vmem:[%s1542 + $0x3c] sm:$0xf]
      %v1559 = vld [vmem:[%s1542 + $0x40] sm:$0xf]
      %v1560 = vld [vmem:[%s1542 + $0x44] sm:$0xf]
      %v1561 = vld [vmem:[%s1542 + $0x48] sm:$0xf]
      %v1562 = vld [vmem:[%s1542 + $0x4c] sm:$0xf]
      %v1563 = vld [vmem:[%s1542 + $0x50] sm:$0xf]
      %v1564 = vld [vmem:[%s1542 + $0x54] sm:$0xf]
      %v1565 = vld [vmem:[%s1542 + $0x58] sm:$0xf]
      %v1566 = vld [vmem:[%s1542 + $0x5c] sm:$0xf]
      %v1567 = vld [vmem:[%s1542 + $0x60] sm:$0xf]
      %v1568 = vld [vmem:[%s1542 + $0x64] sm:$0xf]
      %v1569 = vld [vmem:[%s1542 + $0x68] sm:$0xf]
      %v1570 = vld [vmem:[%s1542 + $0x6c] sm:$0xf]
      %v1571 = vld [vmem:[%s1542 + $0x70] sm:$0xf]
      %v1572 = vld [vmem:[%s1542 + $0x74] sm:$0xf]
      %v1573 = vld [vmem:[%s1542 + $0x78] sm:$0xf]
      %v1574 = vld [vmem:[%s1542 + $0x7c] sm:$0xf]
      %v1598 = vunpack.c.l.b16 %v1519
      %v1599 = vunpack.c.h.b16 %v1519
      %v1600 = vunpack.c.l.b16 %v1520
      %v1601 = vunpack.c.h.b16 %v1520
      %v1602 = vunpack.c.l.b16 %v1521
      %v1603 = vunpack.c.h.b16 %v1521
      %v1604 = vunpack.c.l.b16 %v1522
      %v1605 = vunpack.c.h.b16 %v1522
      %v1606 = vunpack.c.l.b16 %v1523
      %v1607 = vunpack.c.h.b16 %v1523
      %v1608 = vunpack.c.l.b16 %v1524
      %v1609 = vunpack.c.h.b16 %v1524
      %v1610 = vunpack.c.l.b16 %v1525
      %v1611 = vunpack.c.h.b16 %v1525
      %v1612 = vunpack.c.l.b16 %v1526
      %v1613 = vunpack.c.h.b16 %v1526
      %v1614 = vunpack.c.l.b16 %v1527
      %v1615 = vunpack.c.h.b16 %v1527
      %v1616 = vunpack.c.l.b16 %v1528
      %v1617 = vunpack.c.h.b16 %v1528
      %v1618 = vunpack.c.l.b16 %v1529
      %v1619 = vunpack.c.h.b16 %v1529
      %v1620 = vunpack.c.l.b16 %v1530
      %v1621 = vunpack.c.h.b16 %v1530
      %v1622 = vunpack.c.l.b16 %v1531
      %v1623 = vunpack.c.h.b16 %v1531
      %v1624 = vunpack.c.l.b16 %v1532
      %v1625 = vunpack.c.h.b16 %v1532
      %v1626 = vunpack.c.l.b16 %v1533
      %v1627 = vunpack.c.h.b16 %v1533
      %v1628 = vunpack.c.l.b16 %v1534
      %v1629 = vunpack.c.h.b16 %v1534
      %v1630 = vunpack.c.l.b16 %v1535
      %v1631 = vunpack.c.h.b16 %v1535
      %v1632 = vunpack.c.l.b16 %v1536
      %v1633 = vunpack.c.h.b16 %v1536
      %v1634 = vunpack.c.l.b16 %v1537
      %v1635 = vunpack.c.h.b16 %v1537
      %v1636 = vunpack.c.l.b16 %v1538
      %v1637 = vunpack.c.h.b16 %v1538
      %v1638 = vunpack.c.l.b16 %v1539
      %v1639 = vunpack.c.h.b16 %v1539
      %v1640 = vunpack.c.l.b16 %v1540
      %v1641 = vunpack.c.h.b16 %v1540
      %v1642 = vunpack.c.l.b16 %v1541
      %v1643 = vunpack.c.h.b16 %v1541
      %v1644 = vpack.c.b16 %v1600, %v1598
      %v1645 = vpack.c.b16 %v1601, %v1599
      %v1646 = vpack.c.b16 %v1604, %v1602
      %v1647 = vpack.c.b16 %v1605, %v1603
      %v1648 = vpack.c.b16 %v1608, %v1606
      %v1649 = vpack.c.b16 %v1609, %v1607
      %v1650 = vpack.c.b16 %v1612, %v1610
      %v1651 = vpack.c.b16 %v1613, %v1611
      %v1652 = vpack.c.b16 %v1616, %v1614
      %v1653 = vpack.c.b16 %v1617, %v1615
      %v1654 = vpack.c.b16 %v1620, %v1618
      %v1655 = vpack.c.b16 %v1621, %v1619
      %v1656 = vpack.c.b16 %v1624, %v1622
      %v1657 = vpack.c.b16 %v1625, %v1623
      %v1658 = vpack.c.b16 %v1628, %v1626
      %v1659 = vpack.c.b16 %v1629, %v1627
      %v1660 = vpack.c.b16 %v1632, %v1630
      %v1661 = vpack.c.b16 %v1633, %v1631
      %v1662 = vpack.c.b16 %v1636, %v1634
      %v1663 = vpack.c.b16 %v1637, %v1635
      %v1664 = vpack.c.b16 %v1640, %v1638
      %v1665 = vpack.c.b16 %v1641, %v1639
      %v1666 = vpack.c.b16 %v1642, %v1642
      %v1667 = vpack.c.b16 %v1643, %v1643
      %v1724 = vunpack.c.l.b16 %v1543
      %v1725 = vunpack.c.l.b16 %v1544
      %v1726 = vunpack.c.l.b16 %v1545
      %v1727 = vunpack.c.l.b16 %v1546
      %v1728 = vunpack.c.l.b16 %v1547
      %v1729 = vunpack.c.l.b16 %v1548
      %v1730 = vunpack.c.l.b16 %v1549
      %v1731 = vunpack.c.l.b16 %v1550
      %v1732 = vunpack.c.l.b16 %v1551
      %v1733 = vunpack.c.l.b16 %v1552
      %v1734 = vunpack.c.l.b16 %v1553
      %v1735 = vunpack.c.l.b16 %v1554
      %v1736 = vunpack.c.l.b16 %v1555
      %v1737 = vunpack.c.l.b16 %v1556
      %v1738 = vunpack.c.l.b16 %v1557
      %v1739 = vunpack.c.l.b16 %v1558
      %v1740 = vunpack.c.l.b16 %v1559
      %v1741 = vunpack.c.l.b16 %v1560
      %v1742 = vunpack.c.l.b16 %v1561
      %v1743 = vunpack.c.l.b16 %v1562
      %v1744 = vunpack.c.l.b16 %v1563
      %v1745 = vunpack.c.l.b16 %v1564
      %v1746 = vunpack.c.l.b16 %v1565
      %v1747 = vunpack.c.l.b16 %v1566
      %v1748 = vunpack.c.l.b16 %v1567
      %v1749 = vunpack.c.l.b16 %v1568
      %v1750 = vunpack.c.l.b16 %v1569
      %v1751 = vunpack.c.l.b16 %v1570
      %v1752 = vunpack.c.l.b16 %v1571
      %v1753 = vunpack.c.l.b16 %v1572
      %v1754 = vunpack.c.l.b16 %v1573
      %v1755 = vunpack.c.l.b16 %v1574
      %v1756 = vpack.c.b16 %v1725, %v1724
      %v1757 = vpack.c.b16 %v1727, %v1726
      %v1758 = vpack.c.b16 %v1729, %v1728
      %v1759 = vpack.c.b16 %v1731, %v1730
      %v1760 = vpack.c.b16 %v1733, %v1732
      %v1761 = vpack.c.b16 %v1735, %v1734
      %v1762 = vpack.c.b16 %v1737, %v1736
      %v1763 = vpack.c.b16 %v1739, %v1738
      %v1764 = vpack.c.b16 %v1741, %v1740
      %v1765 = vpack.c.b16 %v1743, %v1742
      %v1766 = vpack.c.b16 %v1745, %v1744
      %v1767 = vpack.c.b16 %v1747, %v1746
      %v1768 = vpack.c.b16 %v1749, %v1748
      %v1769 = vpack.c.b16 %v1751, %v1750
      %v1770 = vpack.c.b16 %v1753, %v1752
      %v1771 = vpack.c.b16 %v1755, %v1754
      %1788 = vmatpush.bf16.msra.mxu0 %v1763
      %1789 = vmatpush.bf16.msra.mxu0 %v1762
      %1790 = vmatpush.bf16.msra.mxu0 %v1761
      %1791 = vmatpush.bf16.msra.mxu0 %v1760
      %1792 = vmatpush.bf16.msra.mxu0 %v1759
      %1793 = vmatpush.bf16.msra.mxu0 %v1758
      %1794 = vmatpush.bf16.msra.mxu0 %v1757
      %1795 = vmatpush.bf16.msra.mxu0 %v1756
      %1796 = vmatmul.bf16.gmra.mxu0 %v1644
      %v1797 = vpop.f32.mrf.mxu0
      %v1798 = vadd.f32 0.0, %v1797
      %v1799 = vpop.f32.mrf.mxu0
      %v1800 = vadd.f32 0.0, %v1799
      %1801 = vmatmul.bf16.gmra.mxu0 %v1646
      %v1802 = vpop.f32.mrf.mxu0
      %v1803 = vadd.f32 0.0, %v1802
      %v1804 = vpop.f32.mrf.mxu0
      %v1805 = vadd.f32 0.0, %v1804
      %1806 = vmatmul.bf16.gmra.mxu0 %v1648
      %v1807 = vpop.f32.mrf.mxu0
      %v1808 = vadd.f32 0.0, %v1807
      %v1809 = vpop.f32.mrf.mxu0
      %v1810 = vadd.f32 0.0, %v1809
      %1811 = vmatmul.bf16.gmra.mxu0 %v1650
      %v1812 = vpop.f32.mrf.mxu0
      %v1813 = vadd.f32 0.0, %v1812
      %v1814 = vpop.f32.mrf.mxu0
      %v1815 = vadd.f32 0.0, %v1814
      %1816 = vmatmul.bf16.gmra.mxu0 %v1652
      %v1817 = vpop.f32.mrf.mxu0
      %v1818 = vadd.f32 0.0, %v1817
      %v1819 = vpop.f32.mrf.mxu0
      %v1820 = vadd.f32 0.0, %v1819
      %1821 = vmatmul.bf16.gmra.mxu0 %v1654
      %v1822 = vpop.f32.mrf.mxu0
      %v1823 = vadd.f32 0.0, %v1822
      %v1824 = vpop.f32.mrf.mxu0
      %v1825 = vadd.f32 0.0, %v1824
      %1826 = vmatmul.bf16.gmra.mxu0 %v1656
      %v1827 = vpop.f32.mrf.mxu0
      %v1828 = vadd.f32 0.0, %v1827
      %v1829 = vpop.f32.mrf.mxu0
      %v1830 = vadd.f32 0.0, %v1829
      %1831 = vmatmul.bf16.gmra.mxu0 %v1658
      %v1832 = vpop.f32.mrf.mxu0
      %v1833 = vadd.f32 0.0, %v1832
      %v1834 = vpop.f32.mrf.mxu0
      %v1835 = vadd.f32 0.0, %v1834
      %1836 = vmatmul.bf16.gmra.mxu0 %v1660
      %v1837 = vpop.f32.mrf.mxu0
      %v1838 = vadd.f32 0.0, %v1837
      %v1839 = vpop.f32.mrf.mxu0
      %v1840 = vadd.f32 0.0, %v1839
      %1841 = vmatmul.bf16.gmra.mxu0 %v1662
      %v1842 = vpop.f32.mrf.mxu0
      %v1843 = vadd.f32 0.0, %v1842
      %v1844 = vpop.f32.mrf.mxu0
      %v1845 = vadd.f32 0.0, %v1844
      %1846 = vmatmul.bf16.gmra.mxu0 %v1664
      %v1847 = vpop.f32.mrf.mxu0
      %v1848 = vadd.f32 0.0, %v1847
      %v1849 = vpop.f32.mrf.mxu0
      %v1850 = vadd.f32 0.0, %v1849
      %1851 = vmatmul.bf16.gmra.mxu0 %v1666
      %v1852 = vpop.f32.mrf.mxu0
      %v1853 = vadd.f32 0.0, %v1852
      %v1854 = vpop.f32.mrf.mxu0
      %1855 = vdwg.mxu0
      %1856 = vmatpush.bf16.msra.mxu0 %v1771
      %1857 = vmatpush.bf16.msra.mxu0 %v1770
      %1858 = vmatpush.bf16.msra.mxu0 %v1769
      %1859 = vmatpush.bf16.msra.mxu0 %v1768
      %1860 = vmatpush.bf16.msra.mxu0 %v1767
      %1861 = vmatpush.bf16.msra.mxu0 %v1766
      %1862 = vmatpush.bf16.msra.mxu0 %v1765
      %1863 = vmatpush.bf16.msra.mxu0 %v1764
      %1864 = vmatmul.bf16.gmra.mxu0 %v1645
      %v1865 = vpop.f32.mrf.mxu0
      %v1866 = vadd.f32 %v1798, %v1865
      %v1867 = vpop.f32.mrf.mxu0
      %v1868 = vadd.f32 %v1800, %v1867
      %1869 = vmatmul.bf16.gmra.mxu0 %v1647
      %v1870 = vpop.f32.mrf.mxu0
      %v1871 = vadd.f32 %v1803, %v1870
      %v1872 = vpop.f32.mrf.mxu0
      %v1873 = vadd.f32 %v1805, %v1872
      %1874 = vmatmul.bf16.gmra.mxu0 %v1649
      %v1875 = vpop.f32.mrf.mxu0
      %v1876 = vadd.f32 %v1808, %v1875
      %v1877 = vpop.f32.mrf.mxu0
      %v1878 = vadd.f32 %v1810, %v1877
      %1879 = vmatmul.bf16.gmra.mxu0 %v1651
      %v1880 = vpop.f32.mrf.mxu0
      %v1881 = vadd.f32 %v1813, %v1880
      %v1882 = vpop.f32.mrf.mxu0
      %v1883 = vadd.f32 %v1815, %v1882
      %1884 = vmatmul.bf16.gmra.mxu0 %v1653
      %v1885 = vpop.f32.mrf.mxu0
      %v1886 = vadd.f32 %v1818, %v1885
      %v1887 = vpop.f32.mrf.mxu0
      %v1888 = vadd.f32 %v1820, %v1887
      %1889 = vmatmul.bf16.gmra.mxu0 %v1655
      %v1890 = vpop.f32.mrf.mxu0
      %v1891 = vadd.f32 %v1823, %v1890
      %v1892 = vpop.f32.mrf.mxu0
      %v1893 = vadd.f32 %v1825, %v1892
      %1894 = vmatmul.bf16.gmra.mxu0 %v1657
      %v1895 = vpop.f32.mrf.mxu0
      %v1896 = vadd.f32 %v1828, %v1895
      %v1897 = vpop.f32.mrf.mxu0
      %v1898 = vadd.f32 %v1830, %v1897
      %1899 = vmatmul.bf16.gmra.mxu0 %v1659
      %v1900 = vpop.f32.mrf.mxu0
      %v1901 = vadd.f32 %v1833, %v1900
      %v1902 = vpop.f32.mrf.mxu0
      %v1903 = vadd.f32 %v1835, %v1902
      %1904 = vmatmul.bf16.gmra.mxu0 %v1661
      %v1905 = vpop.f32.mrf.mxu0
      %v1906 = vadd.f32 %v1838, %v1905
      %v1907 = vpop.f32.mrf.mxu0
      %v1908 = vadd.f32 %v1840, %v1907
      %1909 = vmatmul.bf16.gmra.mxu0 %v1663
      %v1910 = vpop.f32.mrf.mxu0
      %v1911 = vadd.f32 %v1843, %v1910
      %v1912 = vpop.f32.mrf.mxu0
      %v1913 = vadd.f32 %v1845, %v1912
      %1914 = vmatmul.bf16.gmra.mxu0 %v1665
      %v1915 = vpop.f32.mrf.mxu0
      %v1916 = vadd.f32 %v1848, %v1915
      %v1917 = vpop.f32.mrf.mxu0
      %v1918 = vadd.f32 %v1850, %v1917
      %1919 = vmatmul.bf16.gmra.mxu0 %v1667
      %v1920 = vpop.f32.mrf.mxu0
      %v1921 = vadd.f32 %v1853, %v1920
      %v1922 = vpop.f32.mrf.mxu0
      %1923 = vdwg.mxu0
      %v1924 = vadd.f32 %v1495, %v1866
      %v1925 = vadd.f32 %v1496, %v1868
      %v1926 = vadd.f32 %v1497, %v1871
      %v1927 = vadd.f32 %v1498, %v1873
      %v1928 = vadd.f32 %v1499, %v1876
      %v1929 = vadd.f32 %v1500, %v1878
      %v1930 = vadd.f32 %v1501, %v1881
      %v1931 = vadd.f32 %v1502, %v1883
      %v1932 = vadd.f32 %v1503, %v1886
      %v1933 = vadd.f32 %v1504, %v1888
      %v1934 = vadd.f32 %v1505, %v1891
      %v1935 = vadd.f32 %v1506, %v1893
      %v1936 = vadd.f32 %v1507, %v1896
      %v1937 = vadd.f32 %v1508, %v1898
      %v1938 = vadd.f32 %v1509, %v1901
      %v1939 = vadd.f32 %v1510, %v1903
      %v1940 = vadd.f32 %v1511, %v1906
      %v1941 = vadd.f32 %v1512, %v1908
      %v1942 = vadd.f32 %v1513, %v1911
      %v1943 = vadd.f32 %v1514, %v1913
      %v1944 = vadd.f32 %v1515, %v1916
      %v1945 = vadd.f32 %v1516, %v1918
      %v1946 = vadd.f32 %v1517, %v1921
      %s1947 = scalar_lea.vmem %s273, 736
      %v1948 = vld [vmem:[%s1947] sm:$0xff]
      %v1949 = vld [vmem:[%s1947 + $0x8] sm:$0xff]
      %v1950 = vld [vmem:[%s1947 + $0x10] sm:$0xff]
      %v1951 = vld [vmem:[%s1947 + $0x18] sm:$0xff]
      %v1952 = vld [vmem:[%s1947 + $0x20] sm:$0xff]
      %v1953 = vld [vmem:[%s1947 + $0x28] sm:$0xff]
      %v1954 = vld [vmem:[%s1947 + $0x30] sm:$0xff]
      %v1955 = vld [vmem:[%s1947 + $0x38] sm:$0xff]
      %v1956 = vld [vmem:[%s1947 + $0x40] sm:$0xff]
      %v1957 = vld [vmem:[%s1947 + $0x48] sm:$0xff]
      %v1958 = vld [vmem:[%s1947 + $0x50] sm:$0xff]
      %v1959 = vld [vmem:[%s1947 + $0x58] sm:$0xff]
      %v1960 = vld [vmem:[%s1947 + $0x60] sm:$0xff]
      %v1961 = vld [vmem:[%s1947 + $0x68] sm:$0xff]
      %v1962 = vld [vmem:[%s1947 + $0x70] sm:$0xff]
      %v1963 = vld [vmem:[%s1947 + $0x78] sm:$0xff]
      %v1964 = vld [vmem:[%s1947 + $0x80] sm:$0xff]
      %v1965 = vld [vmem:[%s1947 + $0x88] sm:$0xff]
      %v1966 = vld [vmem:[%s1947 + $0x90] sm:$0xff]
      %v1967 = vld [vmem:[%s1947 + $0x98] sm:$0xff]
      %v1968 = vld [vmem:[%s1947 + $0xa0] sm:$0xff]
      %v1969 = vld [vmem:[%s1947 + $0xa8] sm:$0xff]
      %v1970 = vld [vmem:[%s1947 + $0xb0] sm:$0x33]
      %s1971 = scalar_lea.vmem %s1, 512
      %v1972 = vld [vmem:[%s1971] sm:$0xf]
      %v1973 = vld [vmem:[%s1971 + $0x4] sm:$0xf]
      %v1974 = vld [vmem:[%s1971 + $0x8] sm:$0xf]
      %v1975 = vld [vmem:[%s1971 + $0xc] sm:$0xf]
      %v1976 = vld [vmem:[%s1971 + $0x10] sm:$0xf]
      %v1977 = vld [vmem:[%s1971 + $0x14] sm:$0xf]
      %v1978 = vld [vmem:[%s1971 + $0x18] sm:$0xf]
      %v1979 = vld [vmem:[%s1971 + $0x1c] sm:$0xf]
      %v1980 = vld [vmem:[%s1971 + $0x20] sm:$0xf]
      %v1981 = vld [vmem:[%s1971 + $0x24] sm:$0xf]
      %v1982 = vld [vmem:[%s1971 + $0x28] sm:$0xf]
      %v1983 = vld [vmem:[%s1971 + $0x2c] sm:$0xf]
      %v1984 = vld [vmem:[%s1971 + $0x30] sm:$0xf]
      %v1985 = vld [vmem:[%s1971 + $0x34] sm:$0xf]
      %v1986 = vld [vmem:[%s1971 + $0x38] sm:$0xf]
      %v1987 = vld [vmem:[%s1971 + $0x3c] sm:$0xf]
      %v1988 = vld [vmem:[%s1971 + $0x40] sm:$0xf]
      %v1989 = vld [vmem:[%s1971 + $0x44] sm:$0xf]
      %v1990 = vld [vmem:[%s1971 + $0x48] sm:$0xf]
      %v1991 = vld [vmem:[%s1971 + $0x4c] sm:$0xf]
      %v1992 = vld [vmem:[%s1971 + $0x50] sm:$0xf]
      %v1993 = vld [vmem:[%s1971 + $0x54] sm:$0xf]
      %v1994 = vld [vmem:[%s1971 + $0x58] sm:$0xf]
      %v1995 = vld [vmem:[%s1971 + $0x5c] sm:$0xf]
      %v1996 = vld [vmem:[%s1971 + $0x60] sm:$0xf]
      %v1997 = vld [vmem:[%s1971 + $0x64] sm:$0xf]
      %v1998 = vld [vmem:[%s1971 + $0x68] sm:$0xf]
      %v1999 = vld [vmem:[%s1971 + $0x6c] sm:$0xf]
      %v2000 = vld [vmem:[%s1971 + $0x70] sm:$0xf]
      %v2001 = vld [vmem:[%s1971 + $0x74] sm:$0xf]
      %v2002 = vld [vmem:[%s1971 + $0x78] sm:$0xf]
      %v2003 = vld [vmem:[%s1971 + $0x7c] sm:$0xf]
      %v2027 = vunpack.c.l.b16 %v1948
      %v2028 = vunpack.c.h.b16 %v1948
      %v2029 = vunpack.c.l.b16 %v1949
      %v2030 = vunpack.c.h.b16 %v1949
      %v2031 = vunpack.c.l.b16 %v1950
      %v2032 = vunpack.c.h.b16 %v1950
      %v2033 = vunpack.c.l.b16 %v1951
      %v2034 = vunpack.c.h.b16 %v1951
      %v2035 = vunpack.c.l.b16 %v1952
      %v2036 = vunpack.c.h.b16 %v1952
      %v2037 = vunpack.c.l.b16 %v1953
      %v2038 = vunpack.c.h.b16 %v1953
      %v2039 = vunpack.c.l.b16 %v1954
      %v2040 = vunpack.c.h.b16 %v1954
      %v2041 = vunpack.c.l.b16 %v1955
      %v2042 = vunpack.c.h.b16 %v1955
      %v2043 = vunpack.c.l.b16 %v1956
      %v2044 = vunpack.c.h.b16 %v1956
      %v2045 = vunpack.c.l.b16 %v1957
      %v2046 = vunpack.c.h.b16 %v1957
      %v2047 = vunpack.c.l.b16 %v1958
      %v2048 = vunpack.c.h.b16 %v1958
      %v2049 = vunpack.c.l.b16 %v1959
      %v2050 = vunpack.c.h.b16 %v1959
      %v2051 = vunpack.c.l.b16 %v1960
      %v2052 = vunpack.c.h.b16 %v1960
      %v2053 = vunpack.c.l.b16 %v1961
      %v2054 = vunpack.c.h.b16 %v1961
      %v2055 = vunpack.c.l.b16 %v1962
      %v2056 = vunpack.c.h.b16 %v1962
      %v2057 = vunpack.c.l.b16 %v1963
      %v2058 = vunpack.c.h.b16 %v1963
      %v2059 = vunpack.c.l.b16 %v1964
      %v2060 = vunpack.c.h.b16 %v1964
      %v2061 = vunpack.c.l.b16 %v1965
      %v2062 = vunpack.c.h.b16 %v1965
      %v2063 = vunpack.c.l.b16 %v1966
      %v2064 = vunpack.c.h.b16 %v1966
      %v2065 = vunpack.c.l.b16 %v1967
      %v2066 = vunpack.c.h.b16 %v1967
      %v2067 = vunpack.c.l.b16 %v1968
      %v2068 = vunpack.c.h.b16 %v1968
      %v2069 = vunpack.c.l.b16 %v1969
      %v2070 = vunpack.c.h.b16 %v1969
      %v2071 = vunpack.c.l.b16 %v1970
      %v2072 = vunpack.c.h.b16 %v1970
      %v2073 = vpack.c.b16 %v2029, %v2027
      %v2074 = vpack.c.b16 %v2030, %v2028
      %v2075 = vpack.c.b16 %v2033, %v2031
      %v2076 = vpack.c.b16 %v2034, %v2032
      %v2077 = vpack.c.b16 %v2037, %v2035
      %v2078 = vpack.c.b16 %v2038, %v2036
      %v2079 = vpack.c.b16 %v2041, %v2039
      %v2080 = vpack.c.b16 %v2042, %v2040
      %v2081 = vpack.c.b16 %v2045, %v2043
      %v2082 = vpack.c.b16 %v2046, %v2044
      %v2083 = vpack.c.b16 %v2049, %v2047
      %v2084 = vpack.c.b16 %v2050, %v2048
      %v2085 = vpack.c.b16 %v2053, %v2051
      %v2086 = vpack.c.b16 %v2054, %v2052
      %v2087 = vpack.c.b16 %v2057, %v2055
      %v2088 = vpack.c.b16 %v2058, %v2056
      %v2089 = vpack.c.b16 %v2061, %v2059
      %v2090 = vpack.c.b16 %v2062, %v2060
      %v2091 = vpack.c.b16 %v2065, %v2063
      %v2092 = vpack.c.b16 %v2066, %v2064
      %v2093 = vpack.c.b16 %v2069, %v2067
      %v2094 = vpack.c.b16 %v2070, %v2068
      %v2095 = vpack.c.b16 %v2071, %v2071
      %v2096 = vpack.c.b16 %v2072, %v2072
      %v2153 = vunpack.c.l.b16 %v1972
      %v2154 = vunpack.c.l.b16 %v1973
      %v2155 = vunpack.c.l.b16 %v1974
      %v2156 = vunpack.c.l.b16 %v1975
      %v2157 = vunpack.c.l.b16 %v1976
      %v2158 = vunpack.c.l.b16 %v1977
      %v2159 = vunpack.c.l.b16 %v1978
      %v2160 = vunpack.c.l.b16 %v1979
      %v2161 = vunpack.c.l.b16 %v1980
      %v2162 = vunpack.c.l.b16 %v1981
      %v2163 = vunpack.c.l.b16 %v1982
      %v2164 = vunpack.c.l.b16 %v1983
      %v2165 = vunpack.c.l.b16 %v1984
      %v2166 = vunpack.c.l.b16 %v1985
      %v2167 = vunpack.c.l.b16 %v1986
      %v2168 = vunpack.c.l.b16 %v1987
      %v2169 = vunpack.c.l.b16 %v1988
      %v2170 = vunpack.c.l.b16 %v1989
      %v2171 = vunpack.c.l.b16 %v1990
      %v2172 = vunpack.c.l.b16 %v1991
      %v2173 = vunpack.c.l.b16 %v1992
      %v2174 = vunpack.c.l.b16 %v1993
      %v2175 = vunpack.c.l.b16 %v1994
      %v2176 = vunpack.c.l.b16 %v1995
      %v2177 = vunpack.c.l.b16 %v1996
      %v2178 = vunpack.c.l.b16 %v1997
      %v2179 = vunpack.c.l.b16 %v1998
      %v2180 = vunpack.c.l.b16 %v1999
      %v2181 = vunpack.c.l.b16 %v2000
      %v2182 = vunpack.c.l.b16 %v2001
      %v2183 = vunpack.c.l.b16 %v2002
      %v2184 = vunpack.c.l.b16 %v2003
      %v2185 = vpack.c.b16 %v2154, %v2153
      %v2186 = vpack.c.b16 %v2156, %v2155
      %v2187 = vpack.c.b16 %v2158, %v2157
      %v2188 = vpack.c.b16 %v2160, %v2159
      %v2189 = vpack.c.b16 %v2162, %v2161
      %v2190 = vpack.c.b16 %v2164, %v2163
      %v2191 = vpack.c.b16 %v2166, %v2165
      %v2192 = vpack.c.b16 %v2168, %v2167
      %v2193 = vpack.c.b16 %v2170, %v2169
      %v2194 = vpack.c.b16 %v2172, %v2171
      %v2195 = vpack.c.b16 %v2174, %v2173
      %v2196 = vpack.c.b16 %v2176, %v2175
      %v2197 = vpack.c.b16 %v2178, %v2177
      %v2198 = vpack.c.b16 %v2180, %v2179
      %v2199 = vpack.c.b16 %v2182, %v2181
      %v2200 = vpack.c.b16 %v2184, %v2183
      %2217 = vmatpush.bf16.msra.mxu0 %v2192
      %2218 = vmatpush.bf16.msra.mxu0 %v2191
      %2219 = vmatpush.bf16.msra.mxu0 %v2190
      %2220 = vmatpush.bf16.msra.mxu0 %v2189
      %2221 = vmatpush.bf16.msra.mxu0 %v2188
      %2222 = vmatpush.bf16.msra.mxu0 %v2187
      %2223 = vmatpush.bf16.msra.mxu0 %v2186
      %2224 = vmatpush.bf16.msra.mxu0 %v2185
      %2225 = vmatmul.bf16.gmra.mxu0 %v2073
      %v2226 = vpop.f32.mrf.mxu0
      %v2227 = vadd.f32 0.0, %v2226
      %v2228 = vpop.f32.mrf.mxu0
      %v2229 = vadd.f32 0.0, %v2228
      %2230 = vmatmul.bf16.gmra.mxu0 %v2075
      %v2231 = vpop.f32.mrf.mxu0
      %v2232 = vadd.f32 0.0, %v2231
      %v2233 = vpop.f32.mrf.mxu0
      %v2234 = vadd.f32 0.0, %v2233
      %2235 = vmatmul.bf16.gmra.mxu0 %v2077
      %v2236 = vpop.f32.mrf.mxu0
      %v2237 = vadd.f32 0.0, %v2236
      %v2238 = vpop.f32.mrf.mxu0
      %v2239 = vadd.f32 0.0, %v2238
      %2240 = vmatmul.bf16.gmra.mxu0 %v2079
      %v2241 = vpop.f32.mrf.mxu0
      %v2242 = vadd.f32 0.0, %v2241
      %v2243 = vpop.f32.mrf.mxu0
      %v2244 = vadd.f32 0.0, %v2243
      %2245 = vmatmul.bf16.gmra.mxu0 %v2081
      %v2246 = vpop.f32.mrf.mxu0
      %v2247 = vadd.f32 0.0, %v2246
      %v2248 = vpop.f32.mrf.mxu0
      %v2249 = vadd.f32 0.0, %v2248
      %2250 = vmatmul.bf16.gmra.mxu0 %v2083
      %v2251 = vpop.f32.mrf.mxu0
      %v2252 = vadd.f32 0.0, %v2251
      %v2253 = vpop.f32.mrf.mxu0
      %v2254 = vadd.f32 0.0, %v2253
      %2255 = vmatmul.bf16.gmra.mxu0 %v2085
      %v2256 = vpop.f32.mrf.mxu0
      %v2257 = vadd.f32 0.0, %v2256
      %v2258 = vpop.f32.mrf.mxu0
      %v2259 = vadd.f32 0.0, %v2258
      %2260 = vmatmul.bf16.gmra.mxu0 %v2087
      %v2261 = vpop.f32.mrf.mxu0
      %v2262 = vadd.f32 0.0, %v2261
      %v2263 = vpop.f32.mrf.mxu0
      %v2264 = vadd.f32 0.0, %v2263
      %2265 = vmatmul.bf16.gmra.mxu0 %v2089
      %v2266 = vpop.f32.mrf.mxu0
      %v2267 = vadd.f32 0.0, %v2266
      %v2268 = vpop.f32.mrf.mxu0
      %v2269 = vadd.f32 0.0, %v2268
      %2270 = vmatmul.bf16.gmra.mxu0 %v2091
      %v2271 = vpop.f32.mrf.mxu0
      %v2272 = vadd.f32 0.0, %v2271
      %v2273 = vpop.f32.mrf.mxu0
      %v2274 = vadd.f32 0.0, %v2273
      %2275 = vmatmul.bf16.gmra.mxu0 %v2093
      %v2276 = vpop.f32.mrf.mxu0
      %v2277 = vadd.f32 0.0, %v2276
      %v2278 = vpop.f32.mrf.mxu0
      %v2279 = vadd.f32 0.0, %v2278
      %2280 = vmatmul.bf16.gmra.mxu0 %v2095
      %v2281 = vpop.f32.mrf.mxu0
      %v2282 = vadd.f32 0.0, %v2281
      %v2283 = vpop.f32.mrf.mxu0
      %2284 = vdwg.mxu0
      %2285 = vmatpush.bf16.msra.mxu0 %v2200
      %2286 = vmatpush.bf16.msra.mxu0 %v2199
      %2287 = vmatpush.bf16.msra.mxu0 %v2198
      %2288 = vmatpush.bf16.msra.mxu0 %v2197
      %2289 = vmatpush.bf16.msra.mxu0 %v2196
      %2290 = vmatpush.bf16.msra.mxu0 %v2195
      %2291 = vmatpush.bf16.msra.mxu0 %v2194
      %2292 = vmatpush.bf16.msra.mxu0 %v2193
      %2293 = vmatmul.bf16.gmra.mxu0 %v2074
      %v2294 = vpop.f32.mrf.mxu0
      %v2295 = vadd.f32 %v2227, %v2294
      %v2296 = vpop.f32.mrf.mxu0
      %v2297 = vadd.f32 %v2229, %v2296
      %2298 = vmatmul.bf16.gmra.mxu0 %v2076
      %v2299 = vpop.f32.mrf.mxu0
      %v2300 = vadd.f32 %v2232, %v2299
      %v2301 = vpop.f32.mrf.mxu0
      %v2302 = vadd.f32 %v2234, %v2301
      %2303 = vmatmul.bf16.gmra.mxu0 %v2078
      %v2304 = vpop.f32.mrf.mxu0
      %v2305 = vadd.f32 %v2237, %v2304
      %v2306 = vpop.f32.mrf.mxu0
      %v2307 = vadd.f32 %v2239, %v2306
      %2308 = vmatmul.bf16.gmra.mxu0 %v2080
      %v2309 = vpop.f32.mrf.mxu0
      %v2310 = vadd.f32 %v2242, %v2309
      %v2311 = vpop.f32.mrf.mxu0
      %v2312 = vadd.f32 %v2244, %v2311
      %2313 = vmatmul.bf16.gmra.mxu0 %v2082
      %v2314 = vpop.f32.mrf.mxu0
      %v2315 = vadd.f32 %v2247, %v2314
      %v2316 = vpop.f32.mrf.mxu0
      %v2317 = vadd.f32 %v2249, %v2316
      %2318 = vmatmul.bf16.gmra.mxu0 %v2084
      %v2319 = vpop.f32.mrf.mxu0
      %v2320 = vadd.f32 %v2252, %v2319
      %v2321 = vpop.f32.mrf.mxu0
      %v2322 = vadd.f32 %v2254, %v2321
      %2323 = vmatmul.bf16.gmra.mxu0 %v2086
      %v2324 = vpop.f32.mrf.mxu0
      %v2325 = vadd.f32 %v2257, %v2324
      %v2326 = vpop.f32.mrf.mxu0
      %v2327 = vadd.f32 %v2259, %v2326
      %2328 = vmatmul.bf16.gmra.mxu0 %v2088
      %v2329 = vpop.f32.mrf.mxu0
      %v2330 = vadd.f32 %v2262, %v2329
      %v2331 = vpop.f32.mrf.mxu0
      %v2332 = vadd.f32 %v2264, %v2331
      %2333 = vmatmul.bf16.gmra.mxu0 %v2090
      %v2334 = vpop.f32.mrf.mxu0
      %v2335 = vadd.f32 %v2267, %v2334
      %v2336 = vpop.f32.mrf.mxu0
      %v2337 = vadd.f32 %v2269, %v2336
      %2338 = vmatmul.bf16.gmra.mxu0 %v2092
      %v2339 = vpop.f32.mrf.mxu0
      %v2340 = vadd.f32 %v2272, %v2339
      %v2341 = vpop.f32.mrf.mxu0
      %v2342 = vadd.f32 %v2274, %v2341
      %2343 = vmatmul.bf16.gmra.mxu0 %v2094
      %v2344 = vpop.f32.mrf.mxu0
      %v2345 = vadd.f32 %v2277, %v2344
      %v2346 = vpop.f32.mrf.mxu0
      %v2347 = vadd.f32 %v2279, %v2346
      %2348 = vmatmul.bf16.gmra.mxu0 %v2096
      %v2349 = vpop.f32.mrf.mxu0
      %v2350 = vadd.f32 %v2282, %v2349
      %v2351 = vpop.f32.mrf.mxu0
      %2352 = vdwg.mxu0
      %v2353 = vadd.f32 %v1924, %v2295
      %v2354 = vadd.f32 %v1925, %v2297
      %v2355 = vadd.f32 %v1926, %v2300
      %v2356 = vadd.f32 %v1927, %v2302
      %v2357 = vadd.f32 %v1928, %v2305
      %v2358 = vadd.f32 %v1929, %v2307
      %v2359 = vadd.f32 %v1930, %v2310
      %v2360 = vadd.f32 %v1931, %v2312
      %v2361 = vadd.f32 %v1932, %v2315
      %v2362 = vadd.f32 %v1933, %v2317
      %v2363 = vadd.f32 %v1934, %v2320
      %v2364 = vadd.f32 %v1935, %v2322
      %v2365 = vadd.f32 %v1936, %v2325
      %v2366 = vadd.f32 %v1937, %v2327
      %v2367 = vadd.f32 %v1938, %v2330
      %v2368 = vadd.f32 %v1939, %v2332
      %v2369 = vadd.f32 %v1940, %v2335
      %v2370 = vadd.f32 %v1941, %v2337
      %v2371 = vadd.f32 %v1942, %v2340
      %v2372 = vadd.f32 %v1943, %v2342
      %v2373 = vadd.f32 %v1944, %v2345
      %v2374 = vadd.f32 %v1945, %v2347
      %v2375 = vadd.f32 %v1946, %v2350
      %v2376 = vld [vmem:[%s2] sm:$0x1]
      %v2378 = vperm.slane %v2376, 0
      %v2380 = vadd.f32 %v2353, %v2378
      %v2381 = vadd.f32 %v2354, %v2378
      %v2382 = vadd.f32 %v2355, %v2378
      %v2383 = vadd.f32 %v2356, %v2378
      %v2384 = vadd.f32 %v2357, %v2378
      %v2385 = vadd.f32 %v2358, %v2378
      %v2386 = vadd.f32 %v2359, %v2378
      %v2387 = vadd.f32 %v2360, %v2378
      %v2388 = vadd.f32 %v2361, %v2378
      %v2389 = vadd.f32 %v2362, %v2378
      %v2390 = vadd.f32 %v2363, %v2378
      %v2391 = vadd.f32 %v2364, %v2378
      %v2392 = vadd.f32 %v2365, %v2378
      %v2393 = vadd.f32 %v2366, %v2378
      %v2394 = vadd.f32 %v2367, %v2378
      %v2395 = vadd.f32 %v2368, %v2378
      %v2396 = vadd.f32 %v2369, %v2378
      %v2397 = vadd.f32 %v2370, %v2378
      %v2398 = vadd.f32 %v2371, %v2378
      %v2399 = vadd.f32 %v2372, %v2378
      %v2400 = vadd.f32 %v2373, %v2378
      %v2401 = vadd.f32 %v2374, %v2378
      %v2402 = vadd.f32 %v2375, %v2378
      %vm2426 = vcmask 1046528
      %v2427 = vrot.slane %v2380, 1
      %v2428 = vrot.slane %v2381, 1
      %v2429 = vsel %vm2426, %v2427, %v2428
      %v2430 = vrot.slane %v2382, 1
      %v2431 = vsel %vm2426, %v2428, %v2430
      %v2432 = vrot.slane %v2383, 1
      %v2433 = vsel %vm2426, %v2430, %v2432
      %v2434 = vrot.slane %v2384, 1
      %v2435 = vsel %vm2426, %v2432, %v2434
      %v2436 = vrot.slane %v2385, 1
      %v2437 = vsel %vm2426, %v2434, %v2436
      %v2438 = vrot.slane %v2386, 1
      %v2439 = vsel %vm2426, %v2436, %v2438
      %v2440 = vrot.slane %v2387, 1
      %v2441 = vsel %vm2426, %v2438, %v2440
      %v2442 = vrot.slane %v2388, 1
      %v2443 = vsel %vm2426, %v2440, %v2442
      %v2444 = vrot.slane %v2389, 1
      %v2445 = vsel %vm2426, %v2442, %v2444
      %v2446 = vrot.slane %v2390, 1
      %v2447 = vsel %vm2426, %v2444, %v2446
      %v2448 = vrot.slane %v2391, 1
      %v2449 = vsel %vm2426, %v2446, %v2448
      %v2450 = vrot.slane %v2392, 1
      %v2451 = vsel %vm2426, %v2448, %v2450
      %v2452 = vrot.slane %v2393, 1
      %v2453 = vsel %vm2426, %v2450, %v2452
      %v2454 = vrot.slane %v2394, 1
      %v2455 = vsel %vm2426, %v2452, %v2454
      %v2456 = vrot.slane %v2395, 1
      %v2457 = vsel %vm2426, %v2454, %v2456
      %v2458 = vrot.slane %v2396, 1
      %v2459 = vsel %vm2426, %v2456, %v2458
      %v2460 = vrot.slane %v2397, 1
      %v2461 = vsel %vm2426, %v2458, %v2460
      %v2462 = vrot.slane %v2398, 1
      %v2463 = vsel %vm2426, %v2460, %v2462
      %v2464 = vrot.slane %v2399, 1
      %v2465 = vsel %vm2426, %v2462, %v2464
      %v2466 = vrot.slane %v2400, 1
      %v2467 = vsel %vm2426, %v2464, %v2466
      %v2468 = vrot.slane %v2401, 1
      %v2469 = vsel %vm2426, %v2466, %v2468
      %v2470 = vrot.slane %v2402, 1
      %v2471 = vsel %vm2426, %v2468, %v2470
      %v2495 = vmax.f32 %v2380, %v2429
      %v2496 = vmax.f32 %v2381, %v2431
      %v2497 = vmax.f32 %v2382, %v2433
      %v2498 = vmax.f32 %v2383, %v2435
      %v2499 = vmax.f32 %v2384, %v2437
      %v2500 = vmax.f32 %v2385, %v2439
      %v2501 = vmax.f32 %v2386, %v2441
      %v2502 = vmax.f32 %v2387, %v2443
      %v2503 = vmax.f32 %v2388, %v2445
      %v2504 = vmax.f32 %v2389, %v2447
      %v2505 = vmax.f32 %v2390, %v2449
      %v2506 = vmax.f32 %v2391, %v2451
      %v2507 = vmax.f32 %v2392, %v2453
      %v2508 = vmax.f32 %v2393, %v2455
      %v2509 = vmax.f32 %v2394, %v2457
      %v2510 = vmax.f32 %v2395, %v2459
      %v2511 = vmax.f32 %v2396, %v2461
      %v2512 = vmax.f32 %v2397, %v2463
      %v2513 = vmax.f32 %v2398, %v2465
      %v2514 = vmax.f32 %v2399, %v2467
      %v2515 = vmax.f32 %v2400, %v2469
      %v2516 = vmax.f32 %v2401, %v2471
      %v2517 = vmax.f32 %v2402, %v2470
      %vm2541 = vcmask 1045504
      %v2542 = vrot.slane %v2495, 2
      %v2543 = vrot.slane %v2496, 2
      %v2544 = vsel %vm2541, %v2542, %v2543
      %v2545 = vrot.slane %v2497, 2
      %v2546 = vsel %vm2541, %v2543, %v2545
      %v2547 = vrot.slane %v2498, 2
      %v2548 = vsel %vm2541, %v2545, %v2547
      %v2549 = vrot.slane %v2499, 2
      %v2550 = vsel %vm2541, %v2547, %v2549
      %v2551 = vrot.slane %v2500, 2
      %v2552 = vsel %vm2541, %v2549, %v2551
      %v2553 = vrot.slane %v2501, 2
      %v2554 = vsel %vm2541, %v2551, %v2553
      %v2555 = vrot.slane %v2502, 2
      %v2556 = vsel %vm2541, %v2553, %v2555
      %v2557 = vrot.slane %v2503, 2
      %v2558 = vsel %vm2541, %v2555, %v2557
      %v2559 = vrot.slane %v2504, 2
      %v2560 = vsel %vm2541, %v2557, %v2559
      %v2561 = vrot.slane %v2505, 2
      %v2562 = vsel %vm2541, %v2559, %v2561
      %v2563 = vrot.slane %v2506, 2
      %v2564 = vsel %vm2541, %v2561, %v2563
      %v2565 = vrot.slane %v2507, 2
      %v2566 = vsel %vm2541, %v2563, %v2565
      %v2567 = vrot.slane %v2508, 2
      %v2568 = vsel %vm2541, %v2565, %v2567
      %v2569 = vrot.slane %v2509, 2
      %v2570 = vsel %vm2541, %v2567, %v2569
      %v2571 = vrot.slane %v2510, 2
      %v2572 = vsel %vm2541, %v2569, %v2571
      %v2573 = vrot.slane %v2511, 2
      %v2574 = vsel %vm2541, %v2571, %v2573
      %v2575 = vrot.slane %v2512, 2
      %v2576 = vsel %vm2541, %v2573, %v2575
      %v2577 = vrot.slane %v2513, 2
      %v2578 = vsel %vm2541, %v2575, %v2577
      %v2579 = vrot.slane %v2514, 2
      %v2580 = vsel %vm2541, %v2577, %v2579
      %v2581 = vrot.slane %v2515, 2
      %v2582 = vsel %vm2541, %v2579, %v2581
      %v2583 = vrot.slane %v2516, 2
      %v2584 = vsel %vm2541, %v2581, %v2583
      %v2585 = vrot.slane %v2517, 2
      %v2586 = vsel %vm2541, %v2583, %v2585
      %v2610 = vmax.f32 %v2495, %v2544
      %v2611 = vmax.f32 %v2496, %v2546
      %v2612 = vmax.f32 %v2497, %v2548
      %v2613 = vmax.f32 %v2498, %v2550
      %v2614 = vmax.f32 %v2499, %v2552
      %v2615 = vmax.f32 %v2500, %v2554
      %v2616 = vmax.f32 %v2501, %v2556
      %v2617 = vmax.f32 %v2502, %v2558
      %v2618 = vmax.f32 %v2503, %v2560
      %v2619 = vmax.f32 %v2504, %v2562
      %v2620 = vmax.f32 %v2505, %v2564
      %v2621 = vmax.f32 %v2506, %v2566
      %v2622 = vmax.f32 %v2507, %v2568
      %v2623 = vmax.f32 %v2508, %v2570
      %v2624 = vmax.f32 %v2509, %v2572
      %v2625 = vmax.f32 %v2510, %v2574
      %v2626 = vmax.f32 %v2511, %v2576
      %v2627 = vmax.f32 %v2512, %v2578
      %v2628 = vmax.f32 %v2513, %v2580
      %v2629 = vmax.f32 %v2514, %v2582
      %v2630 = vmax.f32 %v2515, %v2584
      %v2631 = vmax.f32 %v2516, %v2586
      %v2632 = vmax.f32 %v2517, %v2585
      %vm2656 = vcmask 1043456
      %v2657 = vrot.slane %v2610, 4
      %v2658 = vrot.slane %v2611, 4
      %v2659 = vsel %vm2656, %v2657, %v2658
      %v2660 = vrot.slane %v2612, 4
      %v2661 = vsel %vm2656, %v2658, %v2660
      %v2662 = vrot.slane %v2613, 4
      %v2663 = vsel %vm2656, %v2660, %v2662
      %v2664 = vrot.slane %v2614, 4
      %v2665 = vsel %vm2656, %v2662, %v2664
      %v2666 = vrot.slane %v2615, 4
      %v2667 = vsel %vm2656, %v2664, %v2666
      %v2668 = vrot.slane %v2616, 4
      %v2669 = vsel %vm2656, %v2666, %v2668
      %v2670 = vrot.slane %v2617, 4
      %v2671 = vsel %vm2656, %v2668, %v2670
      %v2672 = vrot.slane %v2618, 4
      %v2673 = vsel %vm2656, %v2670, %v2672
      %v2674 = vrot.slane %v2619, 4
      %v2675 = vsel %vm2656, %v2672, %v2674
      %v2676 = vrot.slane %v2620, 4
      %v2677 = vsel %vm2656, %v2674, %v2676
      %v2678 = vrot.slane %v2621, 4
      %v2679 = vsel %vm2656, %v2676, %v2678
      %v2680 = vrot.slane %v2622, 4
      %v2681 = vsel %vm2656, %v2678, %v2680
      %v2682 = vrot.slane %v2623, 4
      %v2683 = vsel %vm2656, %v2680, %v2682
      %v2684 = vrot.slane %v2624, 4
      %v2685 = vsel %vm2656, %v2682, %v2684
      %v2686 = vrot.slane %v2625, 4
      %v2687 = vsel %vm2656, %v2684, %v2686
      %v2688 = vrot.slane %v2626, 4
      %v2689 = vsel %vm2656, %v2686, %v2688
      %v2690 = vrot.slane %v2627, 4
      %v2691 = vsel %vm2656, %v2688, %v2690
      %v2692 = vrot.slane %v2628, 4
      %v2693 = vsel %vm2656, %v2690, %v2692
      %v2694 = vrot.slane %v2629, 4
      %v2695 = vsel %vm2656, %v2692, %v2694
      %v2696 = vrot.slane %v2630, 4
      %v2697 = vsel %vm2656, %v2694, %v2696
      %v2698 = vrot.slane %v2631, 4
      %v2699 = vsel %vm2656, %v2696, %v2698
      %v2700 = vrot.slane %v2632, 4
      %v2701 = vsel %vm2656, %v2698, %v2700
      %v2724 = vmax.f32 %v2610, %v2659
      %v2725 = vmax.f32 %v2611, %v2661
      %v2726 = vmax.f32 %v2612, %v2663
      %v2727 = vmax.f32 %v2613, %v2665
      %v2728 = vmax.f32 %v2614, %v2667
      %v2729 = vmax.f32 %v2615, %v2669
      %v2730 = vmax.f32 %v2616, %v2671
      %v2731 = vmax.f32 %v2617, %v2673
      %v2732 = vmax.f32 %v2618, %v2675
      %v2733 = vmax.f32 %v2619, %v2677
      %v2734 = vmax.f32 %v2620, %v2679
      %v2735 = vmax.f32 %v2621, %v2681
      %v2736 = vmax.f32 %v2622, %v2683
      %v2737 = vmax.f32 %v2623, %v2685
      %v2738 = vmax.f32 %v2624, %v2687
      %v2739 = vmax.f32 %v2625, %v2689
      %v2740 = vmax.f32 %v2626, %v2691
      %v2741 = vmax.f32 %v2627, %v2693
      %v2742 = vmax.f32 %v2628, %v2695
      %v2743 = vmax.f32 %v2629, %v2697
      %v2744 = vmax.f32 %v2630, %v2699
      %v2745 = vmax.f32 %v2631, %v2701
      %v2746 = vmax.f32 %v2724, %v2725
      %v2747 = vmax.f32 %v2725, %v2726
      %v2748 = vmax.f32 %v2726, %v2727
      %v2749 = vmax.f32 %v2727, %v2728
      %v2750 = vmax.f32 %v2728, %v2729
      %v2751 = vmax.f32 %v2729, %v2730
      %v2752 = vmax.f32 %v2730, %v2731
      %v2753 = vmax.f32 %v2731, %v2732
      %v2754 = vmax.f32 %v2732, %v2733
      %v2755 = vmax.f32 %v2733, %v2734
      %v2756 = vmax.f32 %v2734, %v2735
      %v2757 = vmax.f32 %v2735, %v2736
      %v2758 = vmax.f32 %v2736, %v2737
      %v2759 = vmax.f32 %v2737, %v2738
      %v2760 = vmax.f32 %v2738, %v2739
      %v2761 = vmax.f32 %v2739, %v2740
      %v2762 = vmax.f32 %v2740, %v2741
      %v2763 = vmax.f32 %v2741, %v2742
      %v2764 = vmax.f32 %v2742, %v2743
      %v2765 = vmax.f32 %v2743, %v2744
      %v2766 = vmax.f32 %v2744, %v2745
      %v2767 = vmax.f32 %v2746, %v2748
      %v2768 = vmax.f32 %v2747, %v2749
      %v2769 = vmax.f32 %v2748, %v2750
      %v2770 = vmax.f32 %v2749, %v2751
      %v2771 = vmax.f32 %v2750, %v2752
      %v2772 = vmax.f32 %v2751, %v2753
      %v2773 = vmax.f32 %v2752, %v2754
      %v2774 = vmax.f32 %v2753, %v2755
      %v2775 = vmax.f32 %v2754, %v2756
      %v2776 = vmax.f32 %v2755, %v2757
      %v2777 = vmax.f32 %v2756, %v2758
      %v2778 = vmax.f32 %v2757, %v2759
      %v2779 = vmax.f32 %v2758, %v2760
      %v2780 = vmax.f32 %v2759, %v2761
      %v2781 = vmax.f32 %v2760, %v2762
      %v2782 = vmax.f32 %v2761, %v2763
      %v2783 = vmax.f32 %v2762, %v2764
      %v2784 = vmax.f32 %v2763, %v2765
      %v2785 = vmax.f32 %v2764, %v2766
      %v2786 = vmax.f32 %v2767, %v2771
      %v2787 = vmax.f32 %v2768, %v2772
      %v2788 = vmax.f32 %v2769, %v2773
      %v2789 = vmax.f32 %v2770, %v2774
      %v2790 = vmax.f32 %v2771, %v2775
      %v2791 = vmax.f32 %v2772, %v2776
      %v2792 = vmax.f32 %v2773, %v2777
      %v2793 = vmax.f32 %v2774, %v2778
      %v2794 = vmax.f32 %v2775, %v2779
      %v2795 = vmax.f32 %v2776, %v2780
      %v2796 = vmax.f32 %v2777, %v2781
      %v2797 = vmax.f32 %v2778, %v2782
      %v2798 = vmax.f32 %v2779, %v2783
      %v2799 = vmax.f32 %v2780, %v2784
      %v2800 = vmax.f32 %v2781, %v2785
      %v2801 = vld [vmem:[%s3] sm:$0xff]
      %v2802 = vld [vmem:[%s3 + $0x8] sm:$0xff]
      %v2803 = vld [vmem:[%s3 + $0x10] sm:$0xf]
      %vm2804 = vcmask 957440
      %v2806 = vsel %vm2804, %v2801, 0
      %v2809 = vsel %vm2804, %v2802, 0
      %v2812 = vsel %vm2804, %v2803, 0
      %vm2814 = vcmask 1044480
      %v2816 = vsel %vm2814, %v2800, 0
      %2818 = vmatpush.msra.mxu0 0.0
      %2819 = vmatpush.msra.mxu0 %v2816
      %2820 = vmatpush.msra.mxu0 %v2799
      %2821 = vmatpush.msra.mxu0 %v2798
      %2822 = vmatpush.msra.mxu0 %v2797
      %2823 = vmatpush.msra.mxu0 %v2796
      %2824 = vmatpush.msra.mxu0 %v2795
      %2825 = vmatpush.msra.mxu0 %v2794
      %2826 = vmatpush.msra.mxu0 %v2793
      %2827 = vmatpush.msra.mxu0 %v2792
      %2828 = vmatpush.msra.mxu0 %v2791
      %2829 = vmatpush.msra.mxu0 %v2790
      %2830 = vmatpush.msra.mxu0 %v2789
      %2831 = vmatpush.msra.mxu0 %v2788
      %2832 = vmatpush.msra.mxu0 %v2787
      %2833 = vmatpush.msra.mxu0 %v2786
      %2834 = vmatmul.f32.gmra.mxu0 %v2806
      %v2835 = vpop.f32.mrf.mxu0
      %v2836 = vadd.f32 0.0, %v2835
      %2837 = vmatmul.f32.gmra.mxu0 %v2809
      %v2838 = vpop.f32.mrf.mxu0
      %v2839 = vadd.f32 0.0, %v2838
      %2840 = vmatmul.f32.gmra.mxu0 %v2812
      %v2841 = vpop.f32.mrf.mxu0
      %v2842 = vadd.f32 0.0, %v2841
      %2843 = vdwg.mxu0
      %v2844 = vmax.f32 %v2836, 0.0
      %v2845 = vmax.f32 %v2839, 0.0
      %v2846 = vmax.f32 %v2842, 0.0
      %v2847 = vld [vmem:[%s4] sm:$0xff]
      %v2848 = vld [vmem:[%s4 + $0x8] sm:$0xff]
      %v2849 = vld [vmem:[%s4 + $0x10] sm:$0xff]
      %v2850 = vld [vmem:[%s4 + $0x18] sm:$0xff]
      %v2851 = vld [vmem:[%s4 + $0x20] sm:$0xff]
      %v2852 = vld [vmem:[%s4 + $0x28] sm:$0xff]
      %v2853 = vld [vmem:[%s4 + $0x30] sm:$0xff]
      %v2854 = vld [vmem:[%s4 + $0x38] sm:$0xff]
      %v2855 = vld [vmem:[%s4 + $0x40] sm:$0xff]
      %v2856 = vld [vmem:[%s4 + $0x48] sm:$0xff]
      %v2857 = vld [vmem:[%s4 + $0x50] sm:$0xff]
      %v2858 = vld [vmem:[%s4 + $0x58] sm:$0xff]
      %v2859 = vld [vmem:[%s4 + $0x60] sm:$0xff]
      %v2860 = vld [vmem:[%s4 + $0x68] sm:$0xff]
      %v2861 = vld [vmem:[%s4 + $0x70] sm:$0xff]
      %v2862 = vld [vmem:[%s4 + $0x78] sm:$0xff]
      %v2863 = vld [vmem:[%s4 + $0x80] sm:$0xff]
      %v2864 = vld [vmem:[%s4 + $0x88] sm:$0xff]
      %v2865 = vld [vmem:[%s4 + $0x90] sm:$0xff]
      %v2866 = vld [vmem:[%s4 + $0x98] sm:$0xff]
      %s2867 = scalar_lea.vmem %s4, 160
      %v2868 = vld [vmem:[%s2867] sm:$0xff]
      %v2869 = vld [vmem:[%s2867 + $0x8] sm:$0xff]
      %v2870 = vld [vmem:[%s2867 + $0x10] sm:$0xff]
      %v2871 = vld [vmem:[%s2867 + $0x18] sm:$0xff]
      %v2872 = vld [vmem:[%s2867 + $0x20] sm:$0xff]
      %v2873 = vld [vmem:[%s2867 + $0x28] sm:$0xff]
      %v2874 = vld [vmem:[%s2867 + $0x30] sm:$0xff]
      %v2875 = vld [vmem:[%s2867 + $0x38] sm:$0xff]
      %v2876 = vld [vmem:[%s2867 + $0x40] sm:$0xff]
      %v2877 = vld [vmem:[%s2867 + $0x48] sm:$0xff]
      %v2878 = vld [vmem:[%s2867 + $0x50] sm:$0xff]
      %v2879 = vld [vmem:[%s2867 + $0x58] sm:$0xff]
      %v2880 = vld [vmem:[%s2867 + $0x60] sm:$0xff]
      %v2881 = vld [vmem:[%s2867 + $0x68] sm:$0xff]
      %v2882 = vld [vmem:[%s2867 + $0x70] sm:$0xff]
      %v2883 = vld [vmem:[%s2867 + $0x78] sm:$0xff]
      %v2884 = vld [vmem:[%s2867 + $0x80] sm:$0xff]
      %v2885 = vld [vmem:[%s2867 + $0x88] sm:$0xff]
      %v2886 = vld [vmem:[%s2867 + $0x90] sm:$0xff]
      %v2887 = vld [vmem:[%s2867 + $0x98] sm:$0xff]
      %v2890 = vrot.slane %v2845, 2
      %v2891 = vrot.slane %v2846, 2
      %v2892 = vsel %vm2541, %v2890, %v2891
      %vm2893 = vcmask 654336
      %v2894 = vsel %vm2893, %v2892, 0
      %v2896 = vsel %vm2893, %v2891, 0
      %2898 = vmatpush.msra.mxu0 0.0
      %2899 = vmatpush.msra.mxu0 0.0
      %2900 = vmatpush.msra.mxu0 0.0
      %2901 = vmatpush.msra.mxu0 0.0
      %2902 = vmatpush.msra.mxu0 0.0
      %2903 = vmatpush.msra.mxu0 0.0
      %2904 = vmatpush.msra.mxu0 %v2886
      %2905 = vmatpush.msra.mxu0 %v2884
      %2906 = vmatpush.msra.mxu0 %v2882
      %2907 = vmatpush.msra.mxu0 %v2880
      %2908 = vmatpush.msra.mxu0 %v2878
      %2909 = vmatpush.msra.mxu0 %v2876
      %2910 = vmatpush.msra.mxu0 %v2874
      %2911 = vmatpush.msra.mxu0 %v2872
      %2912 = vmatpush.msra.mxu0 %v2870
      %2913 = vmatpush.msra.mxu0 %v2868
      %2914 = vmatmul.f32.gmra.mxu0 %v2894
      %v2915 = vpop.f32.mrf.mxu0
      %v2916 = vadd.f32 0.0, %v2915
      %2917 = vmatmul.f32.gmra.mxu0 %v2896
      %v2918 = vpop.f32.mrf.mxu0
      %v2919 = vadd.f32 0.0, %v2918
      %2920 = vdwg.mxu0
      %2921 = vmatpush.msra.mxu0 0.0
      %2922 = vmatpush.msra.mxu0 0.0
      %2923 = vmatpush.msra.mxu0 0.0
      %2924 = vmatpush.msra.mxu0 0.0
      %2925 = vmatpush.msra.mxu0 0.0
      %2926 = vmatpush.msra.mxu0 0.0
      %2927 = vmatpush.msra.mxu0 %v2887
      %2928 = vmatpush.msra.mxu0 %v2885
      %2929 = vmatpush.msra.mxu0 %v2883
      %2930 = vmatpush.msra.mxu0 %v2881
      %2931 = vmatpush.msra.mxu0 %v2879
      %2932 = vmatpush.msra.mxu0 %v2877
      %2933 = vmatpush.msra.mxu0 %v2875
      %2934 = vmatpush.msra.mxu0 %v2873
      %2935 = vmatpush.msra.mxu0 %v2871
      %2936 = vmatpush.msra.mxu0 %v2869
      %2937 = vmatmul.f32.gmra.mxu0 %v2894
      %v2938 = vpop.f32.mrf.mxu0
      %v2939 = vadd.f32 0.0, %v2938
      %2940 = vmatmul.f32.gmra.mxu0 %v2896
      %v2941 = vpop.f32.mrf.mxu0
      %v2942 = vadd.f32 0.0, %v2941
      %2943 = vdwg.mxu0
      %v2945 = vsel %vm2893, %v2844, 0
      %v2947 = vsel %vm2893, %v2845, 0
      %2949 = vmatpush.msra.mxu0 0.0
      %2950 = vmatpush.msra.mxu0 0.0
      %2951 = vmatpush.msra.mxu0 0.0
      %2952 = vmatpush.msra.mxu0 0.0
      %2953 = vmatpush.msra.mxu0 0.0
      %2954 = vmatpush.msra.mxu0 0.0
      %2955 = vmatpush.msra.mxu0 %v2865
      %2956 = vmatpush.msra.mxu0 %v2863
      %2957 = vmatpush.msra.mxu0 %v2861
      %2958 = vmatpush.msra.mxu0 %v2859
      %2959 = vmatpush.msra.mxu0 %v2857
      %2960 = vmatpush.msra.mxu0 %v2855
      %2961 = vmatpush.msra.mxu0 %v2853
      %2962 = vmatpush.msra.mxu0 %v2851
      %2963 = vmatpush.msra.mxu0 %v2849
      %2964 = vmatpush.msra.mxu0 %v2847
      %2965 = vmatmul.f32.gmra.mxu0 %v2945
      %v2966 = vpop.f32.mrf.mxu0
      %v2967 = vadd.f32 %v2916, %v2966
      %2968 = vmatmul.f32.gmra.mxu0 %v2947
      %v2969 = vpop.f32.mrf.mxu0
      %v2970 = vadd.f32 %v2919, %v2969
      %2971 = vdwg.mxu0
      %2972 = vmatpush.msra.mxu0 0.0
      %2973 = vmatpush.msra.mxu0 0.0
      %2974 = vmatpush.msra.mxu0 0.0
      %2975 = vmatpush.msra.mxu0 0.0
      %2976 = vmatpush.msra.mxu0 0.0
      %2977 = vmatpush.msra.mxu0 0.0
      %2978 = vmatpush.msra.mxu0 %v2866
      %2979 = vmatpush.msra.mxu0 %v2864
      %2980 = vmatpush.msra.mxu0 %v2862
      %2981 = vmatpush.msra.mxu0 %v2860
      %2982 = vmatpush.msra.mxu0 %v2858
      %2983 = vmatpush.msra.mxu0 %v2856
      %2984 = vmatpush.msra.mxu0 %v2854
      %2985 = vmatpush.msra.mxu0 %v2852
      %2986 = vmatpush.msra.mxu0 %v2850
      %2987 = vmatpush.msra.mxu0 %v2848
      %2988 = vmatmul.f32.gmra.mxu0 %v2945
      %v2989 = vpop.f32.mrf.mxu0
      %v2990 = vadd.f32 %v2939, %v2989
      %2991 = vmatmul.f32.gmra.mxu0 %v2947
      %v2992 = vpop.f32.mrf.mxu0
      %v2993 = vadd.f32 %v2942, %v2992
      %2994 = vdwg.mxu0
      %v2995 = vld [vmem:[%s5] sm:$0x3]
      %v2997 = vperm.slane %v2995, 0
      %v2998 = vperm.slane %v2995, 1
      %v3001 = vadd.f32 %v2967, %v2997
      %v3002 = vadd.f32 %v2990, %v2998
      %v3003 = vadd.f32 %v2970, %v2997
      %v3004 = vadd.f32 %v2993, %v2998
      %v3009 = vrot.slane %v3001, 1
      %v3010 = vrot.slane %v3003, 1
      %v3011 = vsel %vm2426, %v3009, %v3010
      %v3012 = vrot.slane %v3002, 1
      %v3013 = vrot.slane %v3004, 1
      %v3014 = vsel %vm2426, %v3012, %v3013
      %v3019 = vmax.f32 %v3001, %v3011
      %v3020 = vmax.f32 %v3002, %v3014
      %v3021 = vmax.f32 %v3003, %v3010
      %v3022 = vmax.f32 %v3004, %v3013
      %v3027 = vrot.slane %v3019, 1
      %v3028 = vrot.slane %v3021, 1
      %v3029 = vsel %vm2426, %v3027, %v3028
      %v3030 = vrot.slane %v3020, 1
      %v3031 = vrot.slane %v3022, 1
      %v3032 = vsel %vm2426, %v3030, %v3031
      %v3035 = vmax.f32 %v3019, %v3029
      %v3036 = vmax.f32 %v3020, %v3032
      %v3037 = vld [vmem:[%s6] sm:$0xf]
      %vm3038 = vcmask 64512
      %v3040 = vsel %vm3038, %v3037, 0
      %3042 = vmatpush.msra.mxu0 0.0
      %3043 = vmatpush.msra.mxu0 0.0
      %3044 = vmatpush.msra.mxu0 0.0
      %3045 = vmatpush.msra.mxu0 0.0
      %3046 = vmatpush.msra.mxu0 0.0
      %3047 = vmatpush.msra.mxu0 0.0
      %3048 = vmatpush.msra.mxu0 0.0
      %3049 = vmatpush.msra.mxu0 0.0
      %3050 = vmatpush.msra.mxu0 0.0
      %3051 = vmatpush.msra.mxu0 0.0
      %3052 = vmatpush.msra.mxu0 0.0
      %3053 = vmatpush.msra.mxu0 0.0
      %3054 = vmatpush.msra.mxu0 0.0
      %3055 = vmatpush.msra.mxu0 0.0
      %3056 = vmatpush.msra.mxu0 0.0
      %3057 = vmatpush.msra.mxu0 %v3035
      %3058 = vmatmul.f32.gmra.mxu0 %v3040
      %v3059 = vpop.f32.mrf.mxu0
      %v3060 = vadd.f32 0.0, %v3059
      %3061 = vdwg.mxu0
      %3062 = vmatpush.msra.mxu0 0.0
      %3063 = vmatpush.msra.mxu0 0.0
      %3064 = vmatpush.msra.mxu0 0.0
      %3065 = vmatpush.msra.mxu0 0.0
      %3066 = vmatpush.msra.mxu0 0.0
      %3067 = vmatpush.msra.mxu0 0.0
      %3068 = vmatpush.msra.mxu0 0.0
      %3069 = vmatpush.msra.mxu0 0.0
      %3070 = vmatpush.msra.mxu0 0.0
      %3071 = vmatpush.msra.mxu0 0.0
      %3072 = vmatpush.msra.mxu0 0.0
      %3073 = vmatpush.msra.mxu0 0.0
      %3074 = vmatpush.msra.mxu0 0.0
      %3075 = vmatpush.msra.mxu0 0.0
      %3076 = vmatpush.msra.mxu0 0.0
      %3077 = vmatpush.msra.mxu0 %v3036
      %3078 = vmatmul.f32.gmra.mxu0 %v3040
      %v3079 = vpop.f32.mrf.mxu0
      %v3080 = vadd.f32 0.0, %v3079
      %3081 = vdwg.mxu0
      %v3082 = vmax.f32 %v3060, 0.0
      %v3083 = vmax.f32 %v3080, 0.0
      %v3086 = vrot.slane %v3083, 4
      %v3087 = vsel %vm2656, %v3082, %v3086
      %vm3089 = vcmask 261124
      %vm3090 = vmor %vm3089, %vm2656
      %3091 = vst.msk [vmem:[%s278] sm:$0xff] %vm3090, %v3087
      %p3092 = scmp.lt.s32.totalorder %s18, 1
      %s3093 = scalar_select %p3092, %s18, 1
      %s3094 = smul.addr %s3093, 2
      %s3095 = smul.addr %s3094, 4
      %s3096 = scalar_lea.vmem %s7, %s3095
      // Predicated region
      $region49: #{ae_block_forward.1} parent=47 // pred_check
        %p3097 = pneg %p188
      $region50: #{ae_block_forward.1} parent=47 // pred_check_branch
        %3099 = sbr.rel (%p3097) target = $region52
      $region51: #{ae_block_forward.1} parent=47 // pred_region
        _
      $region52: #{ae_block_forward.1} parent=47 // pred_fallthru
        _
    $region48: #{ae_block_forward.1} parent=5 // pred_fallthru
      _
    %p3100 = scmp.le.s32.totalorder 2, %s13
    // Predicated region
    $region53: #{ae_block_forward.1} parent=5 // pred_check
      %p3101 = pneg %p3100
    $region54: #{ae_block_forward.1} parent=5 // pred_check_branch
      %3103 = sbr.rel (%p3101) target = $region56
    $region55: #{ae_block_forward.1} parent=5 // pred_region
      %s3104 = ssub.s32 %s13, 2
      // Predicated region
      $region57: #{ae_block_forward.1} parent=55 // pred_check
        %p3105 = pneg %p194
      $region58: #{ae_block_forward.1} parent=55 // pred_check_branch
        %3107 = sbr.rel (%p3105) target = $region60
      $region59: #{ae_block_forward.1} parent=55 // pred_region
        %p3108 = scmp.lt.s32.totalorder %s19, 1
        %s3109 = scalar_select %p3108, %s19, 1
        %s3110 = smul.addr %s3109, 2
        %s3111 = smul.addr %s3110, 4
        %s3112 = scalar_lea.vmem %s7, %s3111
      $region60: #{ae_block_forward.1} parent=55 // pred_fallthru
        _
    $region56: #{ae_block_forward.1} parent=5 // pred_fallthru
      _
  $region6: #{ae_block_forward.1} parent=0 // loop_footer
    %s17 = sadd.s32 1, %s13
  $region7: #{ae_block_forward.1} parent=0 // loop_footer_branch
    %12 = sbr.rel target = $region3
  $region8: #{ae_block_forward.1} parent=0 // loop_exit
    _

</llo_original>
